<compile_context>
chip_gen: v6e
topology: v6e:2x2x1
jax: 0.10.0
libtpu: 0.0.40
codegen_flags: <defaults>
</compile_context>

<pallas_src>
import math

import jax
import jax.numpy as jnp
from jax.experimental import pallas as pl
from jax.experimental.pallas import tpu as pltpu

# ---- small "roberta-base-like" config (scaled down) -------------------------
H = 32          # hidden size            (roberta-base: 768)
NH = 4          # attention heads        (roberta-base: 12)
HD = H // NH    # head dim
I = 128         # intermediate size 4*H  (roberta-base: 3072)
LN_EPS = 1e-5   # config.layer_norm_eps
NUM_LAYERS = 2  # encoder.layer[start_layer:end_layer] with start=0, end=2


def _layernorm(x, g, b):
    mu = jnp.mean(x, axis=-1, keepdims=True)
    var = jnp.mean((x - mu) ** 2, axis=-1, keepdims=True)
    return (x - mu) * jax.lax.rsqrt(var + LN_EPS) * g + b


def _gelu(x):
    # HF Roberta uses exact (erf-based) GELU.
    return 0.5 * x * (1.0 + jax.lax.erf(x * (1.0 / math.sqrt(2.0))))


def _encoder_kernel(hid_ref, bias_ref,
                    wqkv_ref, bqkv_ref, wo3_ref, bo_ref, g1_ref, b1_ref,
                    wi_ref, bi_ref, w2_ref, b2_ref, g2_ref, be2_ref,
                    out_ref, x_sc):
    """Grid = (batch_tile [parallel], layer [arbitrary]).  One batch item's rows per tile;
    hidden state carried in x_sc across the layer axis; per-layer weights streamed in."""
    bf16 = jnp.bfloat16
    S = hid_ref.shape[0]
    l = pl.program_id(1)
    scale = 1.0 / math.sqrt(HD)

    # Layer 0: load this batch tile's hidden rows into the resident carrier.
    @pl.when(l == 0)
    def _():
        x_sc[...] = hid_ref[...]

    x = x_sc[...]                                            # (S, H) f32 master activations

    # ---- fused QKV projection: one (S, H) @ (H, 3H) matmul --------------------
    qkv = jnp.dot(x.astype(bf16), wqkv_ref[0],
                  preferred_element_type=jnp.float32) + bqkv_ref[0]   # (S, 3H) f32

    # Head-major stacks (NH, S, HD); heads then batched through single einsums.
    q3 = jnp.stack([qkv[:, h * HD:(h + 1) * HD] for h in range(NH)], axis=0).astype(bf16)
    k3 = jnp.stack([qkv[:, H + h * HD:H + (h + 1) * HD] for h in range(NH)], axis=0).astype(bf16)
    v3 = jnp.stack([qkv[:, 2 * H + h * HD:2 * H + (h + 1) * HD] for h in range(NH)], axis=0).astype(bf16)

    # ---- multi-head self-attention (heads batched, f32 softmax statistics) ----
    s = jnp.einsum("hqd,hkd->hqk", q3, k3,
                   preferred_element_type=jnp.float32) * scale         # (NH, S, S)
    s = s + bias_ref[...]                                              # (1,1,S) broadcast
    s = s - jnp.max(s, axis=-1, keepdims=True)
    p = jnp.exp(s)
    p = p * pl.reciprocal(jnp.sum(p, axis=-1, keepdims=True), approx=True)
    # TODO(synk): at roberta-base scale (S>=512) flash-tile the key axis so the softmax runs on a
    # lane-dense (>=128) last dim; at S=8 this is left as a single small block.

    ctx = jnp.einsum("hqk,hkd->hqd", p.astype(bf16), v3,
                     preferred_element_type=jnp.float32)               # (NH, S, HD)

    # ---- attention output dense: heads-batched (NH,S,HD)@(NH,HD,H), summed over heads.
    # Equivalent to concat_h(ctx_h) @ wo, but never materializes a lane-sliced ctx scratch.
    attn_h = jnp.einsum("hqd,hdf->hqf", ctx.astype(bf16), wo3_ref[0],
                        preferred_element_type=jnp.float32)            # (NH, S, H)
    attn = jnp.sum(attn_h, axis=0) + bo_ref[0]                         # (S, H)

    x1 = _layernorm(attn + x, g1_ref[0], b1_ref[0])

    # ---- feed-forward (GELU) + residual + LayerNorm ----------------------------
    inter = _gelu(jnp.dot(x1.astype(bf16), wi_ref[0],
                          preferred_element_type=jnp.float32) + bi_ref[0])
    ffn = jnp.dot(inter.astype(bf16), w2_ref[0],
                  preferred_element_type=jnp.float32) + b2_ref[0]
    new_x = _layernorm(ffn + x1, g2_ref[0], be2_ref[0])

    x_sc[...] = new_x                                        # carry to next layer step

    @pl.when(l == pl.num_programs(1) - 1)
    def _():
        out_ref[...] = new_x.astype(out_ref.dtype)           # single HBM writeback per tile


def prepare_encoder_params(layer_params):
    """One-time (model-load) weight preparation: stack layers along a leading axis, fuse Q|K|V
    into one (H, 3H) weight, pre-split wo by head to (NH, HD, H), cast matmul weights to bf16.
    Hoisted out of the forward call so no per-call HBM re-copies / extra launches."""
    bf16 = jnp.bfloat16
    stack = lambda name: jnp.stack([p[name] for p in layer_params])
    L = len(layer_params)
    wqkv = jnp.concatenate([stack("wq"), stack("wk"), stack("wv")], axis=-1).astype(bf16)  # (L,H,3H)
    bqkv = jnp.concatenate([stack("bq"), stack("bk"), stack("bv")], axis=-1)               # (L,1,3H)
    # TODO(synk): on v7x, optionally store wo3/wi/w2 in fp8 with per-tensor scales to halve
    # weight DMA (v7x MXU supports bf16+fp8); kept bf16 here for v5e/v6e portability.
    return {
        "wqkv": wqkv, "bqkv": bqkv,
        "wo3": stack("wo").reshape(L, NH, HD, H).astype(bf16),   # (L,NH,HD,H) head-split
        "bo": stack("bo"),
        "g1": stack("ln1_g"), "b1": stack("ln1_b"),
        "wi": stack("wi").astype(bf16), "bi": stack("bi"),
        "w2": stack("w2").astype(bf16), "b2": stack("b2"),
        "g2": stack("ln2_g"), "be2": stack("ln2_b"),
    }


def roberta_partial_encoder_pallas(hidden, mask, enc_params):
    """Fused encoder stack. hidden: (B,S,H) f32, mask: (B,S) f32 in {0,1}.
    enc_params: output of prepare_encoder_params (cached at model-load time)."""
    B, S, _ = hidden.shape
    L = enc_params["wqkv"].shape[0]
    f32 = hidden.dtype

    # Reshapes done in the wrapper (free XLA layout plumbing, not in-kernel VMEM copies).
    x2d = hidden.reshape(B * S, H)
    bias = ((1.0 - mask.astype(f32)) * -10000.0).reshape(B, 1, S)   # extended mask bias, once

    p = enc_params
    weights = [p["wqkv"], p["bqkv"], p["wo3"], p["bo"], p["g1"], p["b1"],
               p["wi"], p["bi"], p["w2"], p["b2"], p["g2"], p["be2"]]

    def layer_spec(arr):
        trailing = (0,) * (arr.ndim - 1)
        # one layer's slice resident at a time, streamed (double-buffered) along the layer axis
        return pl.BlockSpec((1,) + arr.shape[1:], lambda b, l, t=trailing: (l,) + t)

    in_row_spec = pl.BlockSpec((S, H), lambda b, l: (b, 0))     # batch item b's rows
    out_row_spec = pl.BlockSpec((S, H), lambda b, l: (b, 0))    # constant across layer axis
    bias_spec = pl.BlockSpec((1, 1, S), lambda b, l: (b, 0, 0))

    # TODO(synk): at roberta-base scale, retune vmem_limit_bytes (and consider pl.Buffered(3) on
    # the streamed weight specs on v5e) once per-layer bf16 weight blocks are ~13.7 MB.
    out2d = pl.pallas_call(
        _encoder_kernel,
        out_shape=jax.ShapeDtypeStruct((B * S, H), f32),
        grid=(B, L),                                            # (batch tile, layer)
        in_specs=[in_row_spec, bias_spec] + [layer_spec(w) for w in weights],
        out_specs=out_row_spec,
        scratch_shapes=[pltpu.VMEM((S, H), jnp.float32)],       # resident hidden-state carrier
        compiler_params=pltpu.CompilerParams(
            dimension_semantics=("parallel", "arbitrary"),
            vmem_limit_bytes=32 * 1024 * 1024),
    )(x2d, bias, *weights)

    return out2d.reshape(B, S, H)


# ---- pure-JAX reference (for correctness check) -----------------------------
def roberta_layer_ref(hidden, mask, p):
    B, S, _ = hidden.shape
    ext = (1.0 - mask)[:, None, None, :].astype(hidden.dtype) * -10000.0   # (B,1,1,S)

    q = hidden @ p["wq"] + p["bq"]
    k = hidden @ p["wk"] + p["bk"]
    v = hidden @ p["wv"] + p["bv"]

    def split(t):
        return t.reshape(B, S, NH, HD).transpose(0, 2, 1, 3)

    qh, kh, vh = split(q), split(k), split(v)
    scores = jnp.einsum("bhqd,bhkd->bhqk", qh, kh) / math.sqrt(HD) + ext
    probs = jax.nn.softmax(scores, axis=-1)
    ctx = jnp.einsum("bhqk,bhkd->bhqd", probs, vh).transpose(0, 2, 1, 3).reshape(B, S, H)

    attn = ctx @ p["wo"] + p["bo"]
    x1 = _layernorm(attn + hidden, p["ln1_g"], p["ln1_b"])
    inter = _gelu(x1 @ p["wi"] + p["bi"])
    ffn = inter @ p["w2"] + p["b2"]
    return _layernorm(ffn + x1, p["ln2_g"], p["ln2_b"])


def roberta_partial_encoder_ref(hidden, mask, layer_params):
    for p in layer_params:
        hidden = roberta_layer_ref(hidden, mask, p)
    return hidden


# ---- deterministic synthetic parameter init ---------------------------------
def init_layer_params(key):
    ks = jax.random.split(key, 12)
    std = 0.02
    f32 = jnp.float32
    return {
        "wq": jax.random.normal(ks[0], (H, H), f32) * std,
        "bq": jax.random.normal(ks[1], (1, H), f32) * std,
        "wk": jax.random.normal(ks[2], (H, H), f32) * std,
        "bk": jax.random.normal(ks[3], (1, H), f32) * std,
        "wv": jax.random.normal(ks[4], (H, H), f32) * std,
        "bv": jax.random.normal(ks[5], (1, H), f32) * std,
        "wo": jax.random.normal(ks[6], (H, H), f32) * std,
        "bo": jax.random.normal(ks[7], (1, H), f32) * std,
        "ln1_g": jnp.ones((1, H), f32),
        "ln1_b": jnp.zeros((1, H), f32),
        "wi": jax.random.normal(ks[8], (H, I), f32) * std,
        "bi": jax.random.normal(ks[9], (1, I), f32) * std,
        "w2": jax.random.normal(ks[10], (I, H), f32) * std,
        "b2": jax.random.normal(ks[11], (1, H), f32) * std,
        "ln2_g": jnp.ones((1, H), f32),
        "ln2_b": jnp.zeros((1, H), f32),
    }


if __name__ == "__main__":
    B, S = 2, 8
    key = jax.random.PRNGKey(0)
    k_hid, k_par = jax.random.split(key)

    hidden_states = jax.random.normal(k_hid, (B, S, H), jnp.float32)
    attention_mask = jnp.ones((B, S), jnp.float32).at[1, 6:].set(0.0)  # pad last 2 tokens of seq 1

    layer_keys = jax.random.split(k_par, NUM_LAYERS)
    layer_params = [init_layer_params(k) for k in layer_keys]

    # One-time weight preparation (model-load time), not per forward call.
    enc_params = jax.tree_util.tree_map(jax.block_until_ready,
                                        prepare_encoder_params(layer_params))

    out = roberta_partial_encoder_pallas(hidden_states, attention_mask, enc_params)
    out = jax.block_until_ready(out)

    ref = roberta_partial_encoder_ref(hidden_states, attention_mask, layer_params)

    assert out.shape == (B, S, H)
    assert bool(jnp.all(jnp.isfinite(out)))
    # bf16 matmuls + approx reciprocal in softmax vs f32 reference => loose tolerance.
    assert bool(jnp.allclose(out, ref, atol=2e-2, rtol=2e-2)), "mismatch vs JAX reference"

    print("KERNEL_OK")
</pallas_src>

<mosaic_0001>
module attributes {stable_mosaic.version = 11 : i64} {
  func.func @_encoder_kernel(%arg0: i32, %arg1: i32, %arg2: memref<8x32xf32, #tpu.memory_space<vmem>>, %arg3: memref<1x1x8xf32, #tpu.memory_space<vmem>>, %arg4: memref<1x32x96xbf16, #tpu.memory_space<vmem>>, %arg5: memref<1x1x96xf32, #tpu.memory_space<vmem>>, %arg6: memref<1x4x8x32xbf16, #tpu.memory_space<vmem>>, %arg7: memref<1x1x32xf32, #tpu.memory_space<vmem>>, %arg8: memref<1x1x32xf32, #tpu.memory_space<vmem>>, %arg9: memref<1x1x32xf32, #tpu.memory_space<vmem>>, %arg10: memref<1x32x128xbf16, #tpu.memory_space<vmem>>, %arg11: memref<1x1x128xf32, #tpu.memory_space<vmem>>, %arg12: memref<1x128x32xbf16, #tpu.memory_space<vmem>>, %arg13: memref<1x1x32xf32, #tpu.memory_space<vmem>>, %arg14: memref<1x1x32xf32, #tpu.memory_space<vmem>>, %arg15: memref<1x1x32xf32, #tpu.memory_space<vmem>>, %arg16: memref<8x32xf32, #tpu.memory_space<vmem>>, %arg17: memref<8x32xf32, #tpu.memory_space<vmem>>) attributes {dimension_semantics = [#tpu.dimension_semantics<parallel>, #tpu.dimension_semantics<arbitrary>], iteration_bounds = array<i64: 2, 2>, scalar_prefetch = 0 : i64, scratch_operands = 1 : i64, tpu.core_type = #tpu.core_type<tc>, window_params = [{transform_indices = @transform_0, window_bounds = array<i64: 8, 32>}, {transform_indices = @transform_1, window_bounds = array<i64: 1, 1, 8>}, {transform_indices = @transform_2, window_bounds = array<i64: 1, 32, 96>}, {transform_indices = @transform_3, window_bounds = array<i64: 1, 1, 96>}, {transform_indices = @transform_4, window_bounds = array<i64: 1, 4, 8, 32>}, {transform_indices = @transform_5, window_bounds = array<i64: 1, 1, 32>}, {transform_indices = @transform_6, window_bounds = array<i64: 1, 1, 32>}, {transform_indices = @transform_7, window_bounds = array<i64: 1, 1, 32>}, {transform_indices = @transform_8, window_bounds = array<i64: 1, 32, 128>}, {transform_indices = @transform_9, window_bounds = array<i64: 1, 1, 128>}, {transform_indices = @transform_10, window_bounds = array<i64: 1, 128, 32>}, {transform_indices = @transform_11, window_bounds = array<i64: 1, 1, 32>}, {transform_indices = @transform_12, window_bounds = array<i64: 1, 1, 32>}, {transform_indices = @transform_13, window_bounds = array<i64: 1, 1, 32>}, {transform_indices = @transform_14, window_bounds = array<i64: 8, 32>}]} {
    %c0_i32 = arith.constant 0 : i32
    %0 = arith.cmpi eq, %arg1, %c0_i32 : i32
    %1 = arith.extui %0 : i1 to i32
    %c0_i32_0 = arith.constant 0 : i32
    %2 = arith.cmpi ne, %1, %c0_i32_0 : i32
    scf.if %2 {
      %c0_67 = arith.constant 0 : index
      %c0_68 = arith.constant 0 : index
      %151 = vector.load %arg2[%c0_67, %c0_68] : memref<8x32xf32, #tpu.memory_space<vmem>>, vector<8x32xf32>
      %c0_69 = arith.constant 0 : index
      %c0_70 = arith.constant 0 : index
      %152 = vector.load %arg17[%c0_69, %c0_70] : memref<8x32xf32, #tpu.memory_space<vmem>>, vector<8x32xf32>
      tpu.vector_store %arg17[%c0_69, %c0_70], %151 {strides = array<i32>} : memref<8x32xf32, #tpu.memory_space<vmem>>, vector<8x32xf32>,
    } else {
    }
    %c0 = arith.constant 0 : index
    %c0_1 = arith.constant 0 : index
    %3 = vector.load %arg17[%c0, %c0_1] : memref<8x32xf32, #tpu.memory_space<vmem>>, vector<8x32xf32>
    %4 = arith.truncf %3 : vector<8x32xf32> to vector<8x32xbf16>
    %c0_2 = arith.constant 0 : index
    %c0_3 = arith.constant 0 : index
    %c0_4 = arith.constant 0 : index
    %5 = vector.load %arg4[%c0_2, %c0_3, %c0_4] : memref<1x32x96xbf16, #tpu.memory_space<vmem>>, vector<1x32x96xbf16>
    %6 = vector.shape_cast %5 : vector<1x32x96xbf16> to vector<32x96xbf16>
    %cst = arith.constant dense<0.000000e+00> : vector<8x96xf32>
    %7 = tpu.matmul %4, %6, %cst {dimension_numbers = #tpu.dot_dimension_numbers<[1], [0], [0], [1], [0, 0, 1, 1], [], []>} : vector<8x32xbf16>, vector<32x96xbf16>, vector<8x96xf32> -> vector<8x96xf32>
    %c0_5 = arith.constant 0 : index
    %c0_6 = arith.constant 0 : index
    %c0_7 = arith.constant 0 : index
    %8 = vector.load %arg5[%c0_5, %c0_6, %c0_7] : memref<1x1x96xf32, #tpu.memory_space<vmem>>, vector<1x1x96xf32>
    %9 = vector.shape_cast %8 : vector<1x1x96xf32> to vector<1x96xf32>
    %10 = vector.broadcast %9 : vector<1x96xf32> to vector<8x96xf32>
    %11 = arith.addf %7, %10 : vector<8x96xf32>
    %12 = vector.extract_strided_slice %11 {offsets = [0, 0], sizes = [8, 8], strides = [1, 1]} : vector<8x96xf32> to vector<8x8xf32>
    %13 = vector.extract_strided_slice %11 {offsets = [0, 8], sizes = [8, 8], strides = [1, 1]} : vector<8x96xf32> to vector<8x8xf32>
    %14 = vector.extract_strided_slice %11 {offsets = [0, 16], sizes = [8, 8], strides = [1, 1]} : vector<8x96xf32> to vector<8x8xf32>
    %15 = vector.extract_strided_slice %11 {offsets = [0, 24], sizes = [8, 8], strides = [1, 1]} : vector<8x96xf32> to vector<8x8xf32>
    %16 = vector.shape_cast %12 : vector<8x8xf32> to vector<1x8x8xf32>
    %17 = vector.shape_cast %13 : vector<8x8xf32> to vector<1x8x8xf32>
    %18 = vector.shape_cast %14 : vector<8x8xf32> to vector<1x8x8xf32>
    %19 = vector.shape_cast %15 : vector<8x8xf32> to vector<1x8x8xf32>
    %20 = tpu.concatenate %16, %17, %18, %19 in 0 : vector<1x8x8xf32>, vector<1x8x8xf32>, vector<1x8x8xf32>, vector<1x8x8xf32> -> vector<4x8x8xf32>
    %21 = arith.truncf %20 : vector<4x8x8xf32> to vector<4x8x8xbf16>
    %22 = vector.extract_strided_slice %11 {offsets = [0, 32], sizes = [8, 8], strides = [1, 1]} : vector<8x96xf32> to vector<8x8xf32>
    %23 = vector.extract_strided_slice %11 {offsets = [0, 40], sizes = [8, 8], strides = [1, 1]} : vector<8x96xf32> to vector<8x8xf32>
    %24 = vector.extract_strided_slice %11 {offsets = [0, 48], sizes = [8, 8], strides = [1, 1]} : vector<8x96xf32> to vector<8x8xf32>
    %25 = vector.extract_strided_slice %11 {offsets = [0, 56], sizes = [8, 8], strides = [1, 1]} : vector<8x96xf32> to vector<8x8xf32>
    %26 = vector.shape_cast %22 : vector<8x8xf32> to vector<1x8x8xf32>
    %27 = vector.shape_cast %23 : vector<8x8xf32> to vector<1x8x8xf32>
    %28 = vector.shape_cast %24 : vector<8x8xf32> to vector<1x8x8xf32>
    %29 = vector.shape_cast %25 : vector<8x8xf32> to vector<1x8x8xf32>
    %30 = tpu.concatenate %26, %27, %28, %29 in 0 : vector<1x8x8xf32>, vector<1x8x8xf32>, vector<1x8x8xf32>, vector<1x8x8xf32> -> vector<4x8x8xf32>
    %31 = arith.truncf %30 : vector<4x8x8xf32> to vector<4x8x8xbf16>
    %32 = vector.extract_strided_slice %11 {offsets = [0, 64], sizes = [8, 8], strides = [1, 1]} : vector<8x96xf32> to vector<8x8xf32>
    %33 = vector.extract_strided_slice %11 {offsets = [0, 72], sizes = [8, 8], strides = [1, 1]} : vector<8x96xf32> to vector<8x8xf32>
    %34 = vector.extract_strided_slice %11 {offsets = [0, 80], sizes = [8, 8], strides = [1, 1]} : vector<8x96xf32> to vector<8x8xf32>
    %35 = vector.extract_strided_slice %11 {offsets = [0, 88], sizes = [8, 8], strides = [1, 1]} : vector<8x96xf32> to vector<8x8xf32>
    %36 = vector.shape_cast %32 : vector<8x8xf32> to vector<1x8x8xf32>
    %37 = vector.shape_cast %33 : vector<8x8xf32> to vector<1x8x8xf32>
    %38 = vector.shape_cast %34 : vector<8x8xf32> to vector<1x8x8xf32>
    %39 = vector.shape_cast %35 : vector<8x8xf32> to vector<1x8x8xf32>
    %40 = tpu.concatenate %36, %37, %38, %39 in 0 : vector<1x8x8xf32>, vector<1x8x8xf32>, vector<1x8x8xf32>, vector<1x8x8xf32> -> vector<4x8x8xf32>
    %41 = arith.truncf %40 : vector<4x8x8xf32> to vector<4x8x8xbf16>
    "tpu.trace_start"() <{level = 10 : i32, message = "hqd,hkd->hqk"}> : () -> ()
    %cst_8 = arith.constant dense<0.000000e+00> : vector<4x8x8xf32>
    %42 = tpu.matmul %21, %31, %cst_8 {dimension_numbers = #tpu.dot_dimension_numbers<[2], [2], [1], [1], [0, 0, 0, 1, 1, 1], [0], [0]>} : vector<4x8x8xbf16>, vector<4x8x8xbf16>, vector<4x8x8xf32> -> vector<4x8x8xf32>
    "tpu.trace_stop"() : () -> ()
    %cst_9 = arith.constant 0.353553385 : f32
    %43 = vector.broadcast %cst_9 : f32 to vector<4x8x8xf32>
    %44 = arith.mulf %42, %43 : vector<4x8x8xf32>
    %c0_10 = arith.constant 0 : index
    %c0_11 = arith.constant 0 : index
    %c0_12 = arith.constant 0 : index
    %45 = vector.load %arg3[%c0_10, %c0_11, %c0_12] : memref<1x1x8xf32, #tpu.memory_space<vmem>>, vector<1x1x8xf32>
    %46 = vector.broadcast %45 : vector<1x1x8xf32> to vector<4x8x8xf32>
    %47 = arith.addf %44, %46 : vector<4x8x8xf32>
    %cst_13 = arith.constant dense<0xFF800000> : vector<4x8xf32>
    %48 = vector.multi_reduction <maximumf>, %47, %cst_13 [2] : vector<4x8x8xf32> to vector<4x8xf32>
    %49 = vector.shape_cast %48 : vector<4x8xf32> to vector<4x8x1xf32>
    %50 = vector.broadcast %49 : vector<4x8x1xf32> to vector<4x8x8xf32>
    %51 = arith.subf %47, %50 : vector<4x8x8xf32>
    %52 = math.exp %51 : vector<4x8x8xf32>
    %cst_14 = arith.constant dense<0.000000e+00> : vector<4x8xf32>
    %53 = vector.multi_reduction <add>, %52, %cst_14 [2] : vector<4x8x8xf32> to vector<4x8xf32>
    %54 = vector.shape_cast %53 : vector<4x8xf32> to vector<4x8x1xf32>
    %55 = tpu.reciprocal %54 {approx = true} : vector<4x8x1xf32> -> vector<4x8x1xf32>
    %56 = vector.broadcast %55 : vector<4x8x1xf32> to vector<4x8x8xf32>
    %57 = arith.mulf %52, %56 : vector<4x8x8xf32>
    %58 = arith.truncf %57 : vector<4x8x8xf32> to vector<4x8x8xbf16>
    "tpu.trace_start"() <{level = 10 : i32, message = "hqk,hkd->hqd"}> : () -> ()
    %cst_15 = arith.constant dense<0.000000e+00> : vector<4x8x8xf32>
    %59 = tpu.matmul %58, %41, %cst_15 {dimension_numbers = #tpu.dot_dimension_numbers<[2], [1], [1], [2], [0, 0, 0, 1, 1, 2], [0], [0]>} : vector<4x8x8xbf16>, vector<4x8x8xbf16>, vector<4x8x8xf32> -> vector<4x8x8xf32>
    "tpu.trace_stop"() : () -> ()
    %60 = arith.truncf %59 : vector<4x8x8xf32> to vector<4x8x8xbf16>
    %c0_16 = arith.constant 0 : index
    %c0_17 = arith.constant 0 : index
    %c0_18 = arith.constant 0 : index
    %c0_19 = arith.constant 0 : index
    %61 = vector.load %arg6[%c0_16, %c0_17, %c0_18, %c0_19] : memref<1x4x8x32xbf16, #tpu.memory_space<vmem>>, vector<1x4x8x32xbf16>
    %62 = vector.shape_cast %61 : vector<1x4x8x32xbf16> to vector<4x8x32xbf16>
    "tpu.trace_start"() <{level = 10 : i32, message = "hqd,hdf->hqf"}> : () -> ()
    %cst_20 = arith.constant dense<0.000000e+00> : vector<4x8x32xf32>
    %63 = tpu.matmul %60, %62, %cst_20 {dimension_numbers = #tpu.dot_dimension_numbers<[2], [1], [1], [2], [0, 0, 0, 1, 1, 2], [0], [0]>} : vector<4x8x8xbf16>, vector<4x8x32xbf16>, vector<4x8x32xf32> -> vector<4x8x32xf32>
    "tpu.trace_stop"() : () -> ()
    %cst_21 = arith.constant dense<0.000000e+00> : vector<8x32xf32>
    %64 = vector.multi_reduction <add>, %63, %cst_21 [0] : vector<4x8x32xf32> to vector<8x32xf32>
    %c0_22 = arith.constant 0 : index
    %c0_23 = arith.constant 0 : index
    %c0_24 = arith.constant 0 : index
    %65 = vector.load %arg7[%c0_22, %c0_23, %c0_24] : memref<1x1x32xf32, #tpu.memory_space<vmem>>, vector<1x1x32xf32>
    %66 = vector.shape_cast %65 : vector<1x1x32xf32> to vector<1x32xf32>
    %67 = vector.broadcast %66 : vector<1x32xf32> to vector<8x32xf32>
    %68 = arith.addf %64, %67 : vector<8x32xf32>
    %69 = arith.addf %68, %3 : vector<8x32xf32>
    %c0_25 = arith.constant 0 : index
    %c0_26 = arith.constant 0 : index
    %c0_27 = arith.constant 0 : index
    %70 = vector.load %arg8[%c0_25, %c0_26, %c0_27] : memref<1x1x32xf32, #tpu.memory_space<vmem>>, vector<1x1x32xf32>
    %71 = vector.shape_cast %70 : vector<1x1x32xf32> to vector<1x32xf32>
    %c0_28 = arith.constant 0 : index
    %c0_29 = arith.constant 0 : index
    %c0_30 = arith.constant 0 : index
    %72 = vector.load %arg9[%c0_28, %c0_29, %c0_30] : memref<1x1x32xf32, #tpu.memory_space<vmem>>, vector<1x1x32xf32>
    %73 = vector.shape_cast %72 : vector<1x1x32xf32> to vector<1x32xf32>
    %cst_31 = arith.constant dense<0.000000e+00> : vector<8xf32>
    %74 = vector.multi_reduction <add>, %69, %cst_31 [1] : vector<8x32xf32> to vector<8xf32>
    %75 = vector.shape_cast %74 : vector<8xf32> to vector<8x1xf32>
    %cst_32 = arith.constant 3.200000e+01 : f32
    %76 = vector.broadcast %cst_32 : f32 to vector<8x1xf32>
    %77 = arith.divf %75, %76 : vector<8x1xf32>
    %78 = vector.broadcast %77 : vector<8x1xf32> to vector<8x32xf32>
    %79 = arith.subf %69, %78 : vector<8x32xf32>
    %80 = arith.mulf %79, %79 : vector<8x32xf32>
    %cst_33 = arith.constant dense<0.000000e+00> : vector<8xf32>
    %81 = vector.multi_reduction <add>, %80, %cst_33 [1] : vector<8x32xf32> to vector<8xf32>
    %82 = vector.shape_cast %81 : vector<8xf32> to vector<8x1xf32>
    %cst_34 = arith.constant 3.200000e+01 : f32
    %83 = vector.broadcast %cst_34 : f32 to vector<8x1xf32>
    %84 = arith.divf %82, %83 : vector<8x1xf32>
    %85 = vector.broadcast %77 : vector<8x1xf32> to vector<8x32xf32>
    %86 = arith.subf %69, %85 : vector<8x32xf32>
    %cst_35 = arith.constant 9.99999974E-6 : f32
    %87 = vector.broadcast %cst_35 : f32 to vector<8x1xf32>
    %88 = arith.addf %84, %87 : vector<8x1xf32>
    %89 = math.rsqrt %88 : vector<8x1xf32>
    %90 = vector.broadcast %89 : vector<8x1xf32> to vector<8x32xf32>
    %91 = arith.mulf %86, %90 : vector<8x32xf32>
    %92 = vector.broadcast %71 : vector<1x32xf32> to vector<8x32xf32>
    %93 = arith.mulf %91, %92 : vector<8x32xf32>
    %94 = vector.broadcast %73 : vector<1x32xf32> to vector<8x32xf32>
    %95 = arith.addf %93, %94 : vector<8x32xf32>
    %96 = arith.truncf %95 : vector<8x32xf32> to vector<8x32xbf16>
    %c0_36 = arith.constant 0 : index
    %c0_37 = arith.constant 0 : index
    %c0_38 = arith.constant 0 : index
    %97 = vector.load %arg10[%c0_36, %c0_37, %c0_38] : memref<1x32x128xbf16, #tpu.memory_space<vmem>>, vector<1x32x128xbf16>
    %98 = vector.shape_cast %97 : vector<1x32x128xbf16> to vector<32x128xbf16>
    %cst_39 = arith.constant dense<0.000000e+00> : vector<8x128xf32>
    %99 = tpu.matmul %96, %98, %cst_39 {dimension_numbers = #tpu.dot_dimension_numbers<[1], [0], [0], [1], [0, 0, 1, 1], [], []>} : vector<8x32xbf16>, vector<32x128xbf16>, vector<8x128xf32> -> vector<8x128xf32>
    %c0_40 = arith.constant 0 : index
    %c0_41 = arith.constant 0 : index
    %c0_42 = arith.constant 0 : index
    %100 = vector.load %arg11[%c0_40, %c0_41, %c0_42] : memref<1x1x128xf32, #tpu.memory_space<vmem>>, vector<1x1x128xf32>
    %101 = vector.shape_cast %100 : vector<1x1x128xf32> to vector<1x128xf32>
    %102 = vector.broadcast %101 : vector<1x128xf32> to vector<8x128xf32>
    %103 = arith.addf %99, %102 : vector<8x128xf32>
    %cst_43 = arith.constant 5.000000e-01 : f32
    %104 = vector.broadcast %cst_43 : f32 to vector<8x128xf32>
    %105 = arith.mulf %104, %103 : vector<8x128xf32>
    %cst_44 = arith.constant 0.707106769 : f32
    %106 = vector.broadcast %cst_44 : f32 to vector<8x128xf32>
    %107 = arith.mulf %103, %106 : vector<8x128xf32>
    %108 = math.erf %107 : vector<8x128xf32>
    %cst_45 = arith.constant 1.000000e+00 : f32
    %109 = vector.broadcast %cst_45 : f32 to vector<8x128xf32>
    %110 = arith.addf %109, %108 : vector<8x128xf32>
    %111 = arith.mulf %105, %110 : vector<8x128xf32>
    %112 = arith.truncf %111 : vector<8x128xf32> to vector<8x128xbf16>
    %c0_46 = arith.constant 0 : index
    %c0_47 = arith.constant 0 : index
    %c0_48 = arith.constant 0 : index
    %113 = vector.load %arg12[%c0_46, %c0_47, %c0_48] : memref<1x128x32xbf16, #tpu.memory_space<vmem>>, vector<1x128x32xbf16>
    %114 = vector.shape_cast %113 : vector<1x128x32xbf16> to vector<128x32xbf16>
    %cst_49 = arith.constant dense<0.000000e+00> : vector<8x32xf32>
    %115 = tpu.matmul %112, %114, %cst_49 {dimension_numbers = #tpu.dot_dimension_numbers<[1], [0], [0], [1], [0, 0, 1, 1], [], []>} : vector<8x128xbf16>, vector<128x32xbf16>, vector<8x32xf32> -> vector<8x32xf32>
    %c0_50 = arith.constant 0 : index
    %c0_51 = arith.constant 0 : index
    %c0_52 = arith.constant 0 : index
    %116 = vector.load %arg13[%c0_50, %c0_51, %c0_52] : memref<1x1x32xf32, #tpu.memory_space<vmem>>, vector<1x1x32xf32>
    %117 = vector.shape_cast %116 : vector<1x1x32xf32> to vector<1x32xf32>
    %118 = vector.broadcast %117 : vector<1x32xf32> to vector<8x32xf32>
    %119 = arith.addf %115, %118 : vector<8x32xf32>
    %120 = arith.addf %119, %95 : vector<8x32xf32>
    %c0_53 = arith.constant 0 : index
    %c0_54 = arith.constant 0 : index
    %c0_55 = arith.constant 0 : index
    %121 = vector.load %arg14[%c0_53, %c0_54, %c0_55] : memref<1x1x32xf32, #tpu.memory_space<vmem>>, vector<1x1x32xf32>
    %122 = vector.shape_cast %121 : vector<1x1x32xf32> to vector<1x32xf32>
    %c0_56 = arith.constant 0 : index
    %c0_57 = arith.constant 0 : index
    %c0_58 = arith.constant 0 : index
    %123 = vector.load %arg15[%c0_56, %c0_57, %c0_58] : memref<1x1x32xf32, #tpu.memory_space<vmem>>, vector<1x1x32xf32>
    %124 = vector.shape_cast %123 : vector<1x1x32xf32> to vector<1x32xf32>
    %cst_59 = arith.constant dense<0.000000e+00> : vector<8xf32>
    %125 = vector.multi_reduction <add>, %120, %cst_59 [1] : vector<8x32xf32> to vector<8xf32>
    %126 = vector.shape_cast %125 : vector<8xf32> to vector<8x1xf32>
    %cst_60 = arith.constant 3.200000e+01 : f32
    %127 = vector.broadcast %cst_60 : f32 to vector<8x1xf32>
    %128 = arith.divf %126, %127 : vector<8x1xf32>
    %129 = vector.broadcast %128 : vector<8x1xf32> to vector<8x32xf32>
    %130 = arith.subf %120, %129 : vector<8x32xf32>
    %131 = arith.mulf %130, %130 : vector<8x32xf32>
    %cst_61 = arith.constant dense<0.000000e+00> : vector<8xf32>
    %132 = vector.multi_reduction <add>, %131, %cst_61 [1] : vector<8x32xf32> to vector<8xf32>
    %133 = vector.shape_cast %132 : vector<8xf32> to vector<8x1xf32>
    %cst_62 = arith.constant 3.200000e+01 : f32
    %134 = vector.broadcast %cst_62 : f32 to vector<8x1xf32>
    %135 = arith.divf %133, %134 : vector<8x1xf32>
    %136 = vector.broadcast %128 : vector<8x1xf32> to vector<8x32xf32>
    %137 = arith.subf %120, %136 : vector<8x32xf32>
    %cst_63 = arith.constant 9.99999974E-6 : f32
    %138 = vector.broadcast %cst_63 : f32 to vector<8x1xf32>
    %139 = arith.addf %135, %138 : vector<8x1xf32>
    %140 = math.rsqrt %139 : vector<8x1xf32>
    %141 = vector.broadcast %140 : vector<8x1xf32> to vector<8x32xf32>
    %142 = arith.mulf %137, %141 : vector<8x32xf32>
    %143 = vector.broadcast %122 : vector<1x32xf32> to vector<8x32xf32>
    %144 = arith.mulf %142, %143 : vector<8x32xf32>
    %145 = vector.broadcast %124 : vector<1x32xf32> to vector<8x32xf32>
    %146 = arith.addf %144, %145 : vector<8x32xf32>
    %c0_64 = arith.constant 0 : index
    %c0_65 = arith.constant 0 : index
    %147 = vector.load %arg17[%c0_64, %c0_65] : memref<8x32xf32, #tpu.memory_space<vmem>>, vector<8x32xf32>
    tpu.vector_store %arg17[%c0_64, %c0_65], %146 {strides = array<i32>} : memref<8x32xf32, #tpu.memory_space<vmem>>, vector<8x32xf32>,
    %c1_i32 = arith.constant 1 : i32
    %148 = arith.cmpi eq, %arg1, %c1_i32 : i32
    %149 = arith.extui %148 : i1 to i32
    %c0_i32_66 = arith.constant 0 : i32
    %150 = arith.cmpi ne, %149, %c0_i32_66 : i32
    scf.if %150 {
      %c0_67 = arith.constant 0 : index
      %c0_68 = arith.constant 0 : index
      %151 = vector.load %arg16[%c0_67, %c0_68] : memref<8x32xf32, #tpu.memory_space<vmem>>, vector<8x32xf32>
      tpu.vector_store %arg16[%c0_67, %c0_68], %146 {strides = array<i32>} : memref<8x32xf32, #tpu.memory_space<vmem>>, vector<8x32xf32>,
    } else {
    }
    return
  }
  func.func @transform_0(%arg0: i32, %arg1: i32) -> (i32, i32) {
    %c0_i32 = arith.constant 0 : i32
    %c0_i32_0 = arith.constant 0 : i32
    return %arg0, %c0_i32 : i32, i32
  }
  func.func @transform_1(%arg0: i32, %arg1: i32) -> (i32, i32, i32) {
    %c0_i32 = arith.constant 0 : i32
    %c0_i32_0 = arith.constant 0 : i32
    %c0_i32_1 = arith.constant 0 : i32
    return %arg0, %c0_i32, %c0_i32_0 : i32, i32, i32
  }
  func.func @transform_2(%arg0: i32, %arg1: i32) -> (i32, i32, i32) {
    %c0_i32 = arith.constant 0 : i32
    %c0_i32_0 = arith.constant 0 : i32
    %c0_i32_1 = arith.constant 0 : i32
    return %arg1, %c0_i32, %c0_i32_0 : i32, i32, i32
  }
  func.func @transform_3(%arg0: i32, %arg1: i32) -> (i32, i32, i32) {
    %c0_i32 = arith.constant 0 : i32
    %c0_i32_0 = arith.constant 0 : i32
    %c0_i32_1 = arith.constant 0 : i32
    return %arg1, %c0_i32, %c0_i32_0 : i32, i32, i32
  }
  func.func @transform_4(%arg0: i32, %arg1: i32) -> (i32, i32, i32, i32) {
    %c0_i32 = arith.constant 0 : i32
    %c0_i32_0 = arith.constant 0 : i32
    %c0_i32_1 = arith.constant 0 : i32
    %c0_i32_2 = arith.constant 0 : i32
    return %arg1, %c0_i32, %c0_i32_0, %c0_i32_1 : i32, i32, i32, i32
  }
  func.func @transform_5(%arg0: i32, %arg1: i32) -> (i32, i32, i32) {
    %c0_i32 = arith.constant 0 : i32
    %c0_i32_0 = arith.constant 0 : i32
    %c0_i32_1 = arith.constant 0 : i32
    return %arg1, %c0_i32, %c0_i32_0 : i32, i32, i32
  }
  func.func @transform_6(%arg0: i32, %arg1: i32) -> (i32, i32, i32) {
    %c0_i32 = arith.constant 0 : i32
    %c0_i32_0 = arith.constant 0 : i32
    %c0_i32_1 = arith.constant 0 : i32
    return %arg1, %c0_i32, %c0_i32_0 : i32, i32, i32
  }
  func.func @transform_7(%arg0: i32, %arg1: i32) -> (i32, i32, i32) {
    %c0_i32 = arith.constant 0 : i32
    %c0_i32_0 = arith.constant 0 : i32
    %c0_i32_1 = arith.constant 0 : i32
    return %arg1, %c0_i32, %c0_i32_0 : i32, i32, i32
  }
  func.func @transform_8(%arg0: i32, %arg1: i32) -> (i32, i32, i32) {
    %c0_i32 = arith.constant 0 : i32
    %c0_i32_0 = arith.constant 0 : i32
    %c0_i32_1 = arith.constant 0 : i32
    return %arg1, %c0_i32, %c0_i32_0 : i32, i32, i32
  }
  func.func @transform_9(%arg0: i32, %arg1: i32) -> (i32, i32, i32) {
    %c0_i32 = arith.constant 0 : i32
    %c0_i32_0 = arith.constant 0 : i32
    %c0_i32_1 = arith.constant 0 : i32
    return %arg1, %c0_i32, %c0_i32_0 : i32, i32, i32
  }
  func.func @transform_10(%arg0: i32, %arg1: i32) -> (i32, i32, i32) {
    %c0_i32 = arith.constant 0 : i32
    %c0_i32_0 = arith.constant 0 : i32
    %c0_i32_1 = arith.constant 0 : i32
    return %arg1, %c0_i32, %c0_i32_0 : i32, i32, i32
  }
  func.func @transform_11(%arg0: i32, %arg1: i32) -> (i32, i32, i32) {
    %c0_i32 = arith.constant 0 : i32
    %c0_i32_0 = arith.constant 0 : i32
    %c0_i32_1 = arith.constant 0 : i32
    return %arg1, %c0_i32, %c0_i32_0 : i32, i32, i32
  }
  func.func @transform_12(%arg0: i32, %arg1: i32) -> (i32, i32, i32) {
    %c0_i32 = arith.constant 0 : i32
    %c0_i32_0 = arith.constant 0 : i32
    %c0_i32_1 = arith.constant 0 : i32
    return %arg1, %c0_i32, %c0_i32_0 : i32, i32, i32
  }
  func.func @transform_13(%arg0: i32, %arg1: i32) -> (i32, i32, i32) {
    %c0_i32 = arith.constant 0 : i32
    %c0_i32_0 = arith.constant 0 : i32
    %c0_i32_1 = arith.constant 0 : i32
    return %arg1, %c0_i32, %c0_i32_0 : i32, i32, i32
  }
  func.func @transform_14(%arg0: i32, %arg1: i32) -> (i32, i32) {
    %c0_i32 = arith.constant 0 : i32
    %c0_i32_0 = arith.constant 0 : i32
    return %arg0, %c0_i32 : i32, i32
  }
}

</mosaic_0001>

<llo_original>
// kernel: tpu_custom_call.1
$region0: #{tpu_custom_call.1}
  #allocation0 [shape = 'u32[]', space=smem, size = 0x4, offset = 0x4, fixed_abs, tag = 'smem constant byte address 0x4 - core index']
  #allocation1 [shape = 'u32[144,128]{1,0:T(1,128)}', space=vmem, size = 0x12000, scoped, tag = 'internal scratch']
  #allocation2 [shape = 'f32[8,32]{1,0:T(8,128)}', space=vmem, size = 0x1000, scoped, tag = 'scratch operand']
  %s0 = inlined_call_operand.vmem [shape: f32[16,32], index: 0, kind: input, shape index: {}]
  %s1 = inlined_call_operand.vmem [shape: f32[2,1,8], index: 1, kind: input, shape index: {}]
  %s2 = inlined_call_operand.vmem [shape: bf16[2,32,96], index: 2, kind: input, shape index: {}]
  %s3 = inlined_call_operand.vmem [shape: f32[2,1,96], index: 3, kind: input, shape index: {}]
  %s4 = inlined_call_operand.vmem [shape: bf16[2,4,8,32], index: 4, kind: input, shape index: {}]
  %s5 = inlined_call_operand.vmem [shape: f32[2,1,32], index: 5, kind: input, shape index: {}]
  %s6 = inlined_call_operand.vmem [shape: f32[2,1,32], index: 6, kind: input, shape index: {}]
  %s7 = inlined_call_operand.vmem [shape: f32[2,1,32], index: 7, kind: input, shape index: {}]
  %s8 = inlined_call_operand.vmem [shape: bf16[2,32,128], index: 8, kind: input, shape index: {}]
  %s9 = inlined_call_operand.vmem [shape: f32[2,1,128], index: 9, kind: input, shape index: {}]
  %s10 = inlined_call_operand.vmem [shape: bf16[2,128,32], index: 10, kind: input, shape index: {}]
  %s11 = inlined_call_operand.vmem [shape: f32[2,1,32], index: 11, kind: input, shape index: {}]
  %s12 = inlined_call_operand.vmem [shape: f32[2,1,32], index: 12, kind: input, shape index: {}]
  %s13 = inlined_call_operand.vmem [shape: f32[2,1,32], index: 13, kind: input, shape index: {}]
  %s14 = inlined_call_operand.hbm [shape: f32[16,32], index: 14, kind: output, shape index: {}]
  %s15 = sld [smem:[#allocation0]]
  $region97: #{tpu_custom_call.1} parent=0
    _
  %s17 = ssub.s32 1, %s15
  %s18 = scalar_select 0, %s17, %s15
  $region1: #{tpu_custom_call.1} parent=0
    #allocation3 [shape = 'u8[8192]{0}', space=vmem, size = 0x2000, scoped, tag = 'output window, operand 0']
    #allocation4 [shape = 's32[2]{0}', space=sflag, size = 0x8, scoped, tag = 'scoped memory for tpu_custom_call.1']
    %19 = vsyncpa [#allocation4], 0
    %s20 = scalar_lea.sflag [#allocation4], 1
    %21 = vsyncpa %s20, 0
    loop: start=0, step=1, limit=6
    $region2: #{tpu_custom_call.1} parent=1 // loop_pre_header
      _
    $region3: #{tpu_custom_call.1} parent=1 // loop_header
      %s23 = sphi 0, %s27
      %p24 = scmp.ge.s32.totalorder %s23, 6
      %s30 = sphi 0, %s42
      %s31 = sphi 0, %s38
      %s32 = sphi 0, %s30
      %s33 = sphi 0, %s31
      %s34 = sphi 0, %s32
      %s35 = sphi 0, %s33
      %s45 = sphi 0, %s47
      %s48 = sphi 0, %s45
      %s49 = sphi 0, %s48
      %s65 = sphi 0, %s49
      %s71 = sphi 0, %s73
      %s74 = sphi 0, %s71
      %s75 = sphi 0, %s74
      %s91 = sphi 0, %s75
      %s97 = sphi 0, %s99
      %s100 = sphi 0, %s97
      %s101 = sphi 0, %s100
      %s117 = sphi 0, %s101
      %s123 = sphi 0, %s125
      %s126 = sphi 0, %s123
      %s127 = sphi 0, %s126
      %s143 = sphi 0, %s127
      %s149 = sphi 0, %s151
      %s152 = sphi 0, %s149
      %s153 = sphi 0, %s152
      %s169 = sphi 0, %s153
      %s175 = sphi 0, %s177
      %s178 = sphi 0, %s175
      %s179 = sphi 0, %s178
      %s195 = sphi 0, %s179
      %s201 = sphi 0, %s203
      %s204 = sphi 0, %s201
      %s205 = sphi 0, %s204
      %s221 = sphi 0, %s205
      %s227 = sphi 0, %s229
      %s230 = sphi 0, %s227
      %s231 = sphi 0, %s230
      %s247 = sphi 0, %s231
      %s253 = sphi 0, %s255
      %s256 = sphi 0, %s253
      %s257 = sphi 0, %s256
      %s273 = sphi 0, %s257
      %s279 = sphi 0, %s281
      %s282 = sphi 0, %s279
      %s283 = sphi 0, %s282
      %s299 = sphi 0, %s283
      %s305 = sphi 0, %s307
      %s308 = sphi 0, %s305
      %s309 = sphi 0, %s308
      %s325 = sphi 0, %s309
      %s331 = sphi 0, %s333
      %s334 = sphi 0, %s331
      %s335 = sphi 0, %s334
      %s351 = sphi 0, %s335
      %s357 = sphi 0, %s359
      %s360 = sphi 0, %s357
      %s361 = sphi 0, %s360
      %s377 = sphi 0, %s361
      %s383 = sphi 0, %s385
      %s386 = sphi 0, %s383
      %s387 = sphi 0, %s386
      %s403 = sphi 0, %s387
      %s409 = sphi 0, %s411
      %s412 = sphi 0, %s409
      %s413 = sphi 0, %s412
      %s429 = sphi 0, %s413
    $region4: #{tpu_custom_call.1} parent=1 // loop_header_branch
      %26 = sbr.rel (%p24) target = $region8
    $region5: #{tpu_custom_call.1} parent=1 // loop_body
      %s28 = ssub.s32 %s23, 1
      %s29 = ssub.s32 %s23, 2
      %s36 = sadd.s32 1, %s31
      %p37 = scmp.ge.s32.totalorder %s36, 2
      %s38 = scalar_select %p37, 0, %s36
      %s39 = sadd.s32 1, %s30
      %s40 = scalar_select %p37, %s39, %s30
      %p41 = scmp.ge.s32.totalorder %s40, 2
      %s42 = scalar_select %p41, 0, %s40
      %s43 = ssub.s32 %s30, %s42
      %p44 = scmp.eq.s32.totalorder %s43, 0
      %s46 = sadd.s32 %s45, 1
      %s47 = scalar_select %p44, %s45, %s46
      %p50 = pneg %p44
      %p51 = scmp.eq.s32.totalorder %s23, 3
      %p52 = por %p50, %p51
      %p53 = scmp.ne.s32.totalorder %s45, %s48
      %p54 = scmp.eq.s32.totalorder %s23, 0
      %p55 = por %p53, %p54
      %p56 = scmp.ne.s32.totalorder %s45, %s48
      %p57 = scmp.eq.s32.totalorder %s28, 3
      %p58 = por %p56, %p57
      %p59 = scmp.ne.s32.totalorder %s48, %s49
      %p60 = scmp.eq.s32.totalorder %s28, 0
      %p61 = por %p59, %p60
      %p62 = scmp.ne.s32.totalorder %s48, %s49
      %p63 = scmp.eq.s32.totalorder %s29, 3
      %p64 = por %p62, %p63
      %p66 = scmp.ne.s32.totalorder %s49, %s65
      %p67 = scmp.eq.s32.totalorder %s29, 0
      %p68 = por %p66, %p67
      %s69 = ssub.s32 %s30, %s42
      %p70 = scmp.eq.s32.totalorder %s69, 0
      %s72 = sadd.s32 %s71, 1
      %s73 = scalar_select %p70, %s71, %s72
      %p76 = pneg %p70
      %p77 = scmp.eq.s32.totalorder %s23, 3
      %p78 = por %p76, %p77
      %p79 = scmp.ne.s32.totalorder %s71, %s74
      %p80 = scmp.eq.s32.totalorder %s23, 0
      %p81 = por %p79, %p80
      %p82 = scmp.ne.s32.totalorder %s71, %s74
      %p83 = scmp.eq.s32.totalorder %s28, 3
      %p84 = por %p82, %p83
      %p85 = scmp.ne.s32.totalorder %s74, %s75
      %p86 = scmp.eq.s32.totalorder %s28, 0
      %p87 = por %p85, %p86
      %p88 = scmp.ne.s32.totalorder %s74, %s75
      %p89 = scmp.eq.s32.totalorder %s29, 3
      %p90 = por %p88, %p89
      %p92 = scmp.ne.s32.totalorder %s75, %s91
      %p93 = scmp.eq.s32.totalorder %s29, 0
      %p94 = por %p92, %p93
      %s95 = ssub.s32 %s31, %s38
      %p96 = scmp.eq.s32.totalorder %s95, 0
      %s98 = sadd.s32 %s97, 1
      %s99 = scalar_select %p96, %s97, %s98
      %p102 = pneg %p96
      %p103 = scmp.eq.s32.totalorder %s23, 3
      %p104 = por %p102, %p103
      %p105 = scmp.ne.s32.totalorder %s97, %s100
      %p106 = scmp.eq.s32.totalorder %s23, 0
      %p107 = por %p105, %p106
      %p108 = scmp.ne.s32.totalorder %s97, %s100
      %p109 = scmp.eq.s32.totalorder %s28, 3
      %p110 = por %p108, %p109
      %p111 = scmp.ne.s32.totalorder %s100, %s101
      %p112 = scmp.eq.s32.totalorder %s28, 0
      %p113 = por %p111, %p112
      %p114 = scmp.ne.s32.totalorder %s100, %s101
      %p115 = scmp.eq.s32.totalorder %s29, 3
      %p116 = por %p114, %p115
      %p118 = scmp.ne.s32.totalorder %s101, %s117
      %p119 = scmp.eq.s32.totalorder %s29, 0
      %p120 = por %p118, %p119
      %s121 = ssub.s32 %s31, %s38
      %p122 = scmp.eq.s32.totalorder %s121, 0
      %s124 = sadd.s32 %s123, 1
      %s125 = scalar_select %p122, %s123, %s124
      %p128 = pneg %p122
      %p129 = scmp.eq.s32.totalorder %s23, 3
      %p130 = por %p128, %p129
      %p131 = scmp.ne.s32.totalorder %s123, %s126
      %p132 = scmp.eq.s32.totalorder %s23, 0
      %p133 = por %p131, %p132
      %p134 = scmp.ne.s32.totalorder %s123, %s126
      %p135 = scmp.eq.s32.totalorder %s28, 3
      %p136 = por %p134, %p135
      %p137 = scmp.ne.s32.totalorder %s126, %s127
      %p138 = scmp.eq.s32.totalorder %s28, 0
      %p139 = por %p137, %p138
      %p140 = scmp.ne.s32.totalorder %s126, %s127
      %p141 = scmp.eq.s32.totalorder %s29, 3
      %p142 = por %p140, %p141
      %p144 = scmp.ne.s32.totalorder %s127, %s143
      %p145 = scmp.eq.s32.totalorder %s29, 0
      %p146 = por %p144, %p145
      %s147 = ssub.s32 %s31, %s38
      %p148 = scmp.eq.s32.totalorder %s147, 0
      %s150 = sadd.s32 %s149, 1
      %s151 = scalar_select %p148, %s149, %s150
      %p154 = pneg %p148
      %p155 = scmp.eq.s32.totalorder %s23, 3
      %p156 = por %p154, %p155
      %p157 = scmp.ne.s32.totalorder %s149, %s152
      %p158 = scmp.eq.s32.totalorder %s23, 0
      %p159 = por %p157, %p158
      %p160 = scmp.ne.s32.totalorder %s149, %s152
      %p161 = scmp.eq.s32.totalorder %s28, 3
      %p162 = por %p160, %p161
      %p163 = scmp.ne.s32.totalorder %s152, %s153
      %p164 = scmp.eq.s32.totalorder %s28, 0
      %p165 = por %p163, %p164
      %p166 = scmp.ne.s32.totalorder %s152, %s153
      %p167 = scmp.eq.s32.totalorder %s29, 3
      %p168 = por %p166, %p167
      %p170 = scmp.ne.s32.totalorder %s153, %s169
      %p171 = scmp.eq.s32.totalorder %s29, 0
      %p172 = por %p170, %p171
      %s173 = ssub.s32 %s31, %s38
      %p174 = scmp.eq.s32.totalorder %s173, 0
      %s176 = sadd.s32 %s175, 1
      %s177 = scalar_select %p174, %s175, %s176
      %p180 = pneg %p174
      %p181 = scmp.eq.s32.totalorder %s23, 3
      %p182 = por %p180, %p181
      %p183 = scmp.ne.s32.totalorder %s175, %s178
      %p184 = scmp.eq.s32.totalorder %s23, 0
      %p185 = por %p183, %p184
      %p186 = scmp.ne.s32.totalorder %s175, %s178
      %p187 = scmp.eq.s32.totalorder %s28, 3
      %p188 = por %p186, %p187
      %p189 = scmp.ne.s32.totalorder %s178, %s179
      %p190 = scmp.eq.s32.totalorder %s28, 0
      %p191 = por %p189, %p190
      %p192 = scmp.ne.s32.totalorder %s178, %s179
      %p193 = scmp.eq.s32.totalorder %s29, 3
      %p194 = por %p192, %p193
      %p196 = scmp.ne.s32.totalorder %s179, %s195
      %p197 = scmp.eq.s32.totalorder %s29, 0
      %p198 = por %p196, %p197
      %s199 = ssub.s32 %s31, %s38
      %p200 = scmp.eq.s32.totalorder %s199, 0
      %s202 = sadd.s32 %s201, 1
      %s203 = scalar_select %p200, %s201, %s202
      %p206 = pneg %p200
      %p207 = scmp.eq.s32.totalorder %s23, 3
      %p208 = por %p206, %p207
      %p209 = scmp.ne.s32.totalorder %s201, %s204
      %p210 = scmp.eq.s32.totalorder %s23, 0
      %p211 = por %p209, %p210
      %p212 = scmp.ne.s32.totalorder %s201, %s204
      %p213 = scmp.eq.s32.totalorder %s28, 3
      %p214 = por %p212, %p213
      %p215 = scmp.ne.s32.totalorder %s204, %s205
      %p216 = scmp.eq.s32.totalorder %s28, 0
      %p217 = por %p215, %p216
      %p218 = scmp.ne.s32.totalorder %s204, %s205
      %p219 = scmp.eq.s32.totalorder %s29, 3
      %p220 = por %p218, %p219
      %p222 = scmp.ne.s32.totalorder %s205, %s221
      %p223 = scmp.eq.s32.totalorder %s29, 0
      %p224 = por %p222, %p223
      %s225 = ssub.s32 %s31, %s38
      %p226 = scmp.eq.s32.totalorder %s225, 0
      %s228 = sadd.s32 %s227, 1
      %s229 = scalar_select %p226, %s227, %s228
      %p232 = pneg %p226
      %p233 = scmp.eq.s32.totalorder %s23, 3
      %p234 = por %p232, %p233
      %p235 = scmp.ne.s32.totalorder %s227, %s230
      %p236 = scmp.eq.s32.totalorder %s23, 0
      %p237 = por %p235, %p236
      %p238 = scmp.ne.s32.totalorder %s227, %s230
      %p239 = scmp.eq.s32.totalorder %s28, 3
      %p240 = por %p238, %p239
      %p241 = scmp.ne.s32.totalorder %s230, %s231
      %p242 = scmp.eq.s32.totalorder %s28, 0
      %p243 = por %p241, %p242
      %p244 = scmp.ne.s32.totalorder %s230, %s231
      %p245 = scmp.eq.s32.totalorder %s29, 3
      %p246 = por %p244, %p245
      %p248 = scmp.ne.s32.totalorder %s231, %s247
      %p249 = scmp.eq.s32.totalorder %s29, 0
      %p250 = por %p248, %p249
      %s251 = ssub.s32 %s31, %s38
      %p252 = scmp.eq.s32.totalorder %s251, 0
      %s254 = sadd.s32 %s253, 1
      %s255 = scalar_select %p252, %s253, %s254
      %p258 = pneg %p252
      %p259 = scmp.eq.s32.totalorder %s23, 3
      %p260 = por %p258, %p259
      %p261 = scmp.ne.s32.totalorder %s253, %s256
      %p262 = scmp.eq.s32.totalorder %s23, 0
      %p263 = por %p261, %p262
      %p264 = scmp.ne.s32.totalorder %s253, %s256
      %p265 = scmp.eq.s32.totalorder %s28, 3
      %p266 = por %p264, %p265
      %p267 = scmp.ne.s32.totalorder %s256, %s257
      %p268 = scmp.eq.s32.totalorder %s28, 0
      %p269 = por %p267, %p268
      %p270 = scmp.ne.s32.totalorder %s256, %s257
      %p271 = scmp.eq.s32.totalorder %s29, 3
      %p272 = por %p270, %p271
      %p274 = scmp.ne.s32.totalorder %s257, %s273
      %p275 = scmp.eq.s32.totalorder %s29, 0
      %p276 = por %p274, %p275
      %s277 = ssub.s32 %s31, %s38
      %p278 = scmp.eq.s32.totalorder %s277, 0
      %s280 = sadd.s32 %s279, 1
      %s281 = scalar_select %p278, %s279, %s280
      %p284 = pneg %p278
      %p285 = scmp.eq.s32.totalorder %s23, 3
      %p286 = por %p284, %p285
      %p287 = scmp.ne.s32.totalorder %s279, %s282
      %p288 = scmp.eq.s32.totalorder %s23, 0
      %p289 = por %p287, %p288
      %p290 = scmp.ne.s32.totalorder %s279, %s282
      %p291 = scmp.eq.s32.totalorder %s28, 3
      %p292 = por %p290, %p291
      %p293 = scmp.ne.s32.totalorder %s282, %s283
      %p294 = scmp.eq.s32.totalorder %s28, 0
      %p295 = por %p293, %p294
      %p296 = scmp.ne.s32.totalorder %s282, %s283
      %p297 = scmp.eq.s32.totalorder %s29, 3
      %p298 = por %p296, %p297
      %p300 = scmp.ne.s32.totalorder %s283, %s299
      %p301 = scmp.eq.s32.totalorder %s29, 0
      %p302 = por %p300, %p301
      %s303 = ssub.s32 %s31, %s38
      %p304 = scmp.eq.s32.totalorder %s303, 0
      %s306 = sadd.s32 %s305, 1
      %s307 = scalar_select %p304, %s305, %s306
      %p310 = pneg %p304
      %p311 = scmp.eq.s32.totalorder %s23, 3
      %p312 = por %p310, %p311
      %p313 = scmp.ne.s32.totalorder %s305, %s308
      %p314 = scmp.eq.s32.totalorder %s23, 0
      %p315 = por %p313, %p314
      %p316 = scmp.ne.s32.totalorder %s305, %s308
      %p317 = scmp.eq.s32.totalorder %s28, 3
      %p318 = por %p316, %p317
      %p319 = scmp.ne.s32.totalorder %s308, %s309
      %p320 = scmp.eq.s32.totalorder %s28, 0
      %p321 = por %p319, %p320
      %p322 = scmp.ne.s32.totalorder %s308, %s309
      %p323 = scmp.eq.s32.totalorder %s29, 3
      %p324 = por %p322, %p323
      %p326 = scmp.ne.s32.totalorder %s309, %s325
      %p327 = scmp.eq.s32.totalorder %s29, 0
      %p328 = por %p326, %p327
      %s329 = ssub.s32 %s31, %s38
      %p330 = scmp.eq.s32.totalorder %s329, 0
      %s332 = sadd.s32 %s331, 1
      %s333 = scalar_select %p330, %s331, %s332
      %p336 = pneg %p330
      %p337 = scmp.eq.s32.totalorder %s23, 3
      %p338 = por %p336, %p337
      %p339 = scmp.ne.s32.totalorder %s331, %s334
      %p340 = scmp.eq.s32.totalorder %s23, 0
      %p341 = por %p339, %p340
      %p342 = scmp.ne.s32.totalorder %s331, %s334
      %p343 = scmp.eq.s32.totalorder %s28, 3
      %p344 = por %p342, %p343
      %p345 = scmp.ne.s32.totalorder %s334, %s335
      %p346 = scmp.eq.s32.totalorder %s28, 0
      %p347 = por %p345, %p346
      %p348 = scmp.ne.s32.totalorder %s334, %s335
      %p349 = scmp.eq.s32.totalorder %s29, 3
      %p350 = por %p348, %p349
      %p352 = scmp.ne.s32.totalorder %s335, %s351
      %p353 = scmp.eq.s32.totalorder %s29, 0
      %p354 = por %p352, %p353
      %s355 = ssub.s32 %s31, %s38
      %p356 = scmp.eq.s32.totalorder %s355, 0
      %s358 = sadd.s32 %s357, 1
      %s359 = scalar_select %p356, %s357, %s358
      %p362 = pneg %p356
      %p363 = scmp.eq.s32.totalorder %s23, 3
      %p364 = por %p362, %p363
      %p365 = scmp.ne.s32.totalorder %s357, %s360
      %p366 = scmp.eq.s32.totalorder %s23, 0
      %p367 = por %p365, %p366
      %p368 = scmp.ne.s32.totalorder %s357, %s360
      %p369 = scmp.eq.s32.totalorder %s28, 3
      %p370 = por %p368, %p369
      %p371 = scmp.ne.s32.totalorder %s360, %s361
      %p372 = scmp.eq.s32.totalorder %s28, 0
      %p373 = por %p371, %p372
      %p374 = scmp.ne.s32.totalorder %s360, %s361
      %p375 = scmp.eq.s32.totalorder %s29, 3
      %p376 = por %p374, %p375
      %p378 = scmp.ne.s32.totalorder %s361, %s377
      %p379 = scmp.eq.s32.totalorder %s29, 0
      %p380 = por %p378, %p379
      %s381 = ssub.s32 %s31, %s38
      %p382 = scmp.eq.s32.totalorder %s381, 0
      %s384 = sadd.s32 %s383, 1
      %s385 = scalar_select %p382, %s383, %s384
      %p388 = pneg %p382
      %p389 = scmp.eq.s32.totalorder %s23, 3
      %p390 = por %p388, %p389
      %p391 = scmp.ne.s32.totalorder %s383, %s386
      %p392 = scmp.eq.s32.totalorder %s23, 0
      %p393 = por %p391, %p392
      %p394 = scmp.ne.s32.totalorder %s383, %s386
      %p395 = scmp.eq.s32.totalorder %s28, 3
      %p396 = por %p394, %p395
      %p397 = scmp.ne.s32.totalorder %s386, %s387
      %p398 = scmp.eq.s32.totalorder %s28, 0
      %p399 = por %p397, %p398
      %p400 = scmp.ne.s32.totalorder %s386, %s387
      %p401 = scmp.eq.s32.totalorder %s29, 3
      %p402 = por %p400, %p401
      %p404 = scmp.ne.s32.totalorder %s387, %s403
      %p405 = scmp.eq.s32.totalorder %s29, 0
      %p406 = por %p404, %p405
      %s407 = ssub.s32 %s30, %s42
      %p408 = scmp.eq.s32.totalorder %s407, 0
      %s410 = sadd.s32 %s409, 1
      %s411 = scalar_select %p408, %s409, %s410
      %p414 = pneg %p408
      %p415 = scmp.eq.s32.totalorder %s23, 3
      %p416 = por %p414, %p415
      %p417 = scmp.ne.s32.totalorder %s409, %s412
      %p418 = scmp.eq.s32.totalorder %s23, 0
      %p419 = por %p417, %p418
      %p420 = scmp.ne.s32.totalorder %s409, %s412
      %p421 = scmp.eq.s32.totalorder %s28, 3
      %p422 = por %p420, %p421
      %p423 = scmp.ne.s32.totalorder %s412, %s413
      %p424 = scmp.eq.s32.totalorder %s28, 0
      %p425 = por %p423, %p424
      %p426 = scmp.ne.s32.totalorder %s412, %s413
      %p427 = scmp.eq.s32.totalorder %s29, 3
      %p428 = por %p426, %p427
      %p430 = scmp.ne.s32.totalorder %s413, %s429
      %p431 = scmp.eq.s32.totalorder %s29, 0
      %p432 = por %p430, %p431
      %p433 = scmp.le.s32.totalorder 1, %s23
      %p434 = scmp.lt.s32.totalorder %s23, 5
      %p435 = pnand %p433, %p434
      %p436 = pneg %p435
      // Predicated region
      $region9: #{tpu_custom_call.1} parent=5 // pred_check
        _
      $region10: #{tpu_custom_call.1} parent=5 // pred_check_branch
        %438 = sbr.rel (%p435) target = $region12
      $region11: #{tpu_custom_call.1} parent=5 // pred_region
        %s439 = ssub.s32 %s23, 1
      $region12: #{tpu_custom_call.1} parent=5 // pred_fallthru
        _
      %p440 = scmp.lt.s32.totalorder %s23, 4
      // Predicated region
      $region13: #{tpu_custom_call.1} parent=5 // pred_check
        %p441 = pneg %p440
      $region14: #{tpu_custom_call.1} parent=5 // pred_check_branch
        %443 = sbr.rel (%p441) target = $region16
      $region15: #{tpu_custom_call.1} parent=5 // pred_region
        // Predicated region
        $region17: #{tpu_custom_call.1} parent=15 // pred_check
          %p444 = pneg %p55
        $region18: #{tpu_custom_call.1} parent=15 // pred_check_branch
          %446 = sbr.rel (%p444) target = $region20
        $region19: #{tpu_custom_call.1} parent=15 // pred_region
          %p447 = scmp.lt.s32.totalorder %s30, 1
          %s448 = scalar_select %p447, %s30, 1
          %s449 = smul.addr %s448, 8
          %s450 = scalar_lea.vmem %s0, %s449
        $region20: #{tpu_custom_call.1} parent=15 // pred_fallthru
          _
        // Predicated region
        $region21: #{tpu_custom_call.1} parent=15 // pred_check
          %p451 = pneg %p81
        $region22: #{tpu_custom_call.1} parent=15 // pred_check_branch
          %453 = sbr.rel (%p451) target = $region24
        $region23: #{tpu_custom_call.1} parent=15 // pred_region
          %p454 = scmp.lt.s32.totalorder %s30, 1
          %s455 = scalar_select %p454, %s30, 1
          %s456 = scalar_lea.vmem %s1, %s455
        $region24: #{tpu_custom_call.1} parent=15 // pred_fallthru
          _
        // Predicated region
        $region25: #{tpu_custom_call.1} parent=15 // pred_check
          %p457 = pneg %p107
        $region26: #{tpu_custom_call.1} parent=15 // pred_check_branch
          %459 = sbr.rel (%p457) target = $region28
        $region27: #{tpu_custom_call.1} parent=15 // pred_region
          %p460 = scmp.lt.s32.totalorder %s31, 1
          %s461 = scalar_select %p460, %s31, 1
          %s462 = smul.addr %s461, 4
          %s463 = smul.addr %s462, 4
          %s464 = scalar_lea.vmem %s2, %s463
        $region28: #{tpu_custom_call.1} parent=15 // pred_fallthru
          _
        // Predicated region
        $region29: #{tpu_custom_call.1} parent=15 // pred_check
          %p465 = pneg %p133
        $region30: #{tpu_custom_call.1} parent=15 // pred_check_branch
          %467 = sbr.rel (%p465) target = $region32
        $region31: #{tpu_custom_call.1} parent=15 // pred_region
          %p468 = scmp.lt.s32.totalorder %s31, 1
          %s469 = scalar_select %p468, %s31, 1
          %s470 = scalar_lea.vmem %s3, %s469
        $region32: #{tpu_custom_call.1} parent=15 // pred_fallthru
          _
        // Predicated region
        $region33: #{tpu_custom_call.1} parent=15 // pred_check
          %p471 = pneg %p159
        $region34: #{tpu_custom_call.1} parent=15 // pred_check_branch
          %473 = sbr.rel (%p471) target = $region36
        $region35: #{tpu_custom_call.1} parent=15 // pred_region
          %p474 = scmp.lt.s32.totalorder %s31, 1
          %s475 = scalar_select %p474, %s31, 1
          %s476 = smul.addr %s475, 4
          %s477 = smul.addr %s476, 4
          %s478 = scalar_lea.vmem %s4, %s477
        $region36: #{tpu_custom_call.1} parent=15 // pred_fallthru
          _
        // Predicated region
        $region37: #{tpu_custom_call.1} parent=15 // pred_check
          %p479 = pneg %p185
        $region38: #{tpu_custom_call.1} parent=15 // pred_check_branch
          %481 = sbr.rel (%p479) target = $region40
        $region39: #{tpu_custom_call.1} parent=15 // pred_region
          %p482 = scmp.lt.s32.totalorder %s31, 1
          %s483 = scalar_select %p482, %s31, 1
          %s484 = scalar_lea.vmem %s5, %s483
        $region40: #{tpu_custom_call.1} parent=15 // pred_fallthru
          _
        // Predicated region
        $region41: #{tpu_custom_call.1} parent=15 // pred_check
          %p485 = pneg %p211
        $region42: #{tpu_custom_call.1} parent=15 // pred_check_branch
          %487 = sbr.rel (%p485) target = $region44
        $region43: #{tpu_custom_call.1} parent=15 // pred_region
          %p488 = scmp.lt.s32.totalorder %s31, 1
          %s489 = scalar_select %p488, %s31, 1
          %s490 = scalar_lea.vmem %s6, %s489
        $region44: #{tpu_custom_call.1} parent=15 // pred_fallthru
          _
        // Predicated region
        $region45: #{tpu_custom_call.1} parent=15 // pred_check
          %p491 = pneg %p237
        $region46: #{tpu_custom_call.1} parent=15 // pred_check_branch
          %493 = sbr.rel (%p491) target = $region48
        $region47: #{tpu_custom_call.1} parent=15 // pred_region
          %p494 = scmp.lt.s32.totalorder %s31, 1
          %s495 = scalar_select %p494, %s31, 1
          %s496 = scalar_lea.vmem %s7, %s495
        $region48: #{tpu_custom_call.1} parent=15 // pred_fallthru
          _
        // Predicated region
        $region49: #{tpu_custom_call.1} parent=15 // pred_check
          %p497 = pneg %p263
        $region50: #{tpu_custom_call.1} parent=15 // pred_check_branch
          %499 = sbr.rel (%p497) target = $region52
        $region51: #{tpu_custom_call.1} parent=15 // pred_region
          %p500 = scmp.lt.s32.totalorder %s31, 1
          %s501 = scalar_select %p500, %s31, 1
          %s502 = smul.addr %s501, 4
          %s503 = smul.addr %s502, 4
          %s504 = scalar_lea.vmem %s8, %s503
        $region52: #{tpu_custom_call.1} parent=15 // pred_fallthru
          _
        // Predicated region
        $region53: #{tpu_custom_call.1} parent=15 // pred_check
          %p505 = pneg %p289
        $region54: #{tpu_custom_call.1} parent=15 // pred_check_branch
          %507 = sbr.rel (%p505) target = $region56
        $region55: #{tpu_custom_call.1} parent=15 // pred_region
          %p508 = scmp.lt.s32.totalorder %s31, 1
          %s509 = scalar_select %p508, %s31, 1
          %s510 = scalar_lea.vmem %s9, %s509
        $region56: #{tpu_custom_call.1} parent=15 // pred_fallthru
          _
        // Predicated region
        $region57: #{tpu_custom_call.1} parent=15 // pred_check
          %p511 = pneg %p315
        $region58: #{tpu_custom_call.1} parent=15 // pred_check_branch
          %513 = sbr.rel (%p511) target = $region60
        $region59: #{tpu_custom_call.1} parent=15 // pred_region
          %p514 = scmp.lt.s32.totalorder %s31, 1
          %s515 = scalar_select %p514, %s31, 1
          %s516 = smul.addr %s515, 16
          %s517 = smul.addr %s516, 4
          %s518 = scalar_lea.vmem %s10, %s517
        $region60: #{tpu_custom_call.1} parent=15 // pred_fallthru
          _
        // Predicated region
        $region61: #{tpu_custom_call.1} parent=15 // pred_check
          %p519 = pneg %p341
        $region62: #{tpu_custom_call.1} parent=15 // pred_check_branch
          %521 = sbr.rel (%p519) target = $region64
        $region63: #{tpu_custom_call.1} parent=15 // pred_region
          %p522 = scmp.lt.s32.totalorder %s31, 1
          %s523 = scalar_select %p522, %s31, 1
          %s524 = scalar_lea.vmem %s11, %s523
        $region64: #{tpu_custom_call.1} parent=15 // pred_fallthru
          _
        // Predicated region
        $region65: #{tpu_custom_call.1} parent=15 // pred_check
          %p525 = pneg %p367
        $region66: #{tpu_custom_call.1} parent=15 // pred_check_branch
          %527 = sbr.rel (%p525) target = $region68
        $region67: #{tpu_custom_call.1} parent=15 // pred_region
          %p528 = scmp.lt.s32.totalorder %s31, 1
          %s529 = scalar_select %p528, %s31, 1
          %s530 = scalar_lea.vmem %s12, %s529
        $region68: #{tpu_custom_call.1} parent=15 // pred_fallthru
          _
        // Predicated region
        $region69: #{tpu_custom_call.1} parent=15 // pred_check
          %p531 = pneg %p393
        $region70: #{tpu_custom_call.1} parent=15 // pred_check_branch
          %533 = sbr.rel (%p531) target = $region72
        $region71: #{tpu_custom_call.1} parent=15 // pred_region
          %p534 = scmp.lt.s32.totalorder %s31, 1
          %s535 = scalar_select %p534, %s31, 1
          %s536 = scalar_lea.vmem %s13, %s535
        $region72: #{tpu_custom_call.1} parent=15 // pred_fallthru
          _
      $region16: #{tpu_custom_call.1} parent=5 // pred_fallthru
        _
      %p537 = scmp.le.s32.totalorder 1, %s23
      %p538 = scmp.lt.s32.totalorder %s23, 5
      %p539 = pnand %p537, %p538
      %p540 = pneg %p539
      // Predicated region
      $region73: #{tpu_custom_call.1} parent=5 // pred_check
        _
      $region74: #{tpu_custom_call.1} parent=5 // pred_check_branch
        %542 = sbr.rel (%p539) target = $region76
      $region75: #{tpu_custom_call.1} parent=5 // pred_region
        %s543 = ssub.s32 %s23, 1
        %p544 = scmp.lt.s32.totalorder %s32, 1
        %s545 = scalar_select %p544, %s32, 1
        %s546 = smul.addr %s545, 8
        %s547 = scalar_lea.vmem %s0, %s546
        %p548 = pneg %p61
        %p549 = pneg %p58
        %p550 = scmp.lt.s32.totalorder %s32, 1
        %s551 = scalar_select %p550, %s32, 1
        %s552 = scalar_lea.vmem %s1, %s551
        %p553 = pneg %p87
        %p554 = pneg %p84
        %p555 = scmp.lt.s32.totalorder %s33, 1
        %s556 = scalar_select %p555, %s33, 1
        %s557 = smul.addr %s556, 4
        %s558 = smul.addr %s557, 4
        %s559 = scalar_lea.vmem %s2, %s558
        %p560 = pneg %p113
        %p561 = pneg %p110
        %p562 = scmp.lt.s32.totalorder %s33, 1
        %s563 = scalar_select %p562, %s33, 1
        %s564 = scalar_lea.vmem %s3, %s563
        %p565 = pneg %p139
        %p566 = pneg %p136
        %p567 = scmp.lt.s32.totalorder %s33, 1
        %s568 = scalar_select %p567, %s33, 1
        %s569 = smul.addr %s568, 4
        %s570 = smul.addr %s569, 4
        %s571 = scalar_lea.vmem %s4, %s570
        %p572 = pneg %p165
        %p573 = pneg %p162
        %p574 = scmp.lt.s32.totalorder %s33, 1
        %s575 = scalar_select %p574, %s33, 1
        %s576 = scalar_lea.vmem %s5, %s575
        %p577 = pneg %p191
        %p578 = pneg %p188
        %p579 = scmp.lt.s32.totalorder %s33, 1
        %s580 = scalar_select %p579, %s33, 1
        %s581 = scalar_lea.vmem %s6, %s580
        %p582 = pneg %p217
        %p583 = pneg %p214
        %p584 = scmp.lt.s32.totalorder %s33, 1
        %s585 = scalar_select %p584, %s33, 1
        %s586 = scalar_lea.vmem %s7, %s585
        %p587 = pneg %p243
        %p588 = pneg %p240
        %p589 = scmp.lt.s32.totalorder %s33, 1
        %s590 = scalar_select %p589, %s33, 1
        %s591 = smul.addr %s590, 4
        %s592 = smul.addr %s591, 4
        %s593 = scalar_lea.vmem %s8, %s592
        %p594 = pneg %p269
        %p595 = pneg %p266
        %p596 = scmp.lt.s32.totalorder %s33, 1
        %s597 = scalar_select %p596, %s33, 1
        %s598 = scalar_lea.vmem %s9, %s597
        %p599 = pneg %p295
        %p600 = pneg %p292
        %p601 = scmp.lt.s32.totalorder %s33, 1
        %s602 = scalar_select %p601, %s33, 1
        %s603 = smul.addr %s602, 16
        %s604 = smul.addr %s603, 4
        %s605 = scalar_lea.vmem %s10, %s604
        %p606 = pneg %p321
        %p607 = pneg %p318
        %p608 = scmp.lt.s32.totalorder %s33, 1
        %s609 = scalar_select %p608, %s33, 1
        %s610 = scalar_lea.vmem %s11, %s609
        %p611 = pneg %p347
        %p612 = pneg %p344
        %p613 = scmp.lt.s32.totalorder %s33, 1
        %s614 = scalar_select %p613, %s33, 1
        %s615 = scalar_lea.vmem %s12, %s614
        %p616 = pneg %p373
        %p617 = pneg %p370
        %p618 = scmp.lt.s32.totalorder %s33, 1
        %s619 = scalar_select %p618, %s33, 1
        %s620 = scalar_lea.vmem %s13, %s619
        %p621 = pneg %p399
        %p622 = pneg %p396
        %p623 = pneg %p425
        %p624 = pneg %p422
        %s625 = sand.u32 %s412, 1
        %s626 = scalar_lea.sflag [#allocation4], %s625
        %s627 = sand.u32 %s412, 1
        %s628 = smul.addr %s627, 8
        %s629 = scalar_lea.vmem [#allocation3], %s628
        %p630 = scmp.lt.s32.totalorder %s32, 1
        %s631 = scalar_select %p630, %s32, 1
        %s632 = smul.addr %s631, 8
        %s633 = scalar_lea.vmem %s0, %s632
        %p634 = scmp.lt.s32.totalorder %s32, 1
        %s635 = scalar_select %p634, %s32, 1
        %s636 = scalar_lea.vmem %s1, %s635
        %p637 = scmp.lt.s32.totalorder %s33, 1
        %s638 = scalar_select %p637, %s33, 1
        %s639 = smul.addr %s638, 4
        %s640 = smul.addr %s639, 4
        %s641 = scalar_lea.vmem %s2, %s640
        %p642 = scmp.lt.s32.totalorder %s33, 1
        %s643 = scalar_select %p642, %s33, 1
        %s644 = scalar_lea.vmem %s3, %s643
        %p645 = scmp.lt.s32.totalorder %s33, 1
        %s646 = scalar_select %p645, %s33, 1
        %s647 = smul.addr %s646, 4
        %s648 = smul.addr %s647, 4
        %s649 = scalar_lea.vmem %s4, %s648
        %p650 = scmp.lt.s32.totalorder %s33, 1
        %s651 = scalar_select %p650, %s33, 1
        %s652 = scalar_lea.vmem %s5, %s651
        %p653 = scmp.lt.s32.totalorder %s33, 1
        %s654 = scalar_select %p653, %s33, 1
        %s655 = scalar_lea.vmem %s6, %s654
        %p656 = scmp.lt.s32.totalorder %s33, 1
        %s657 = scalar_select %p656, %s33, 1
        %s658 = scalar_lea.vmem %s7, %s657
        %p659 = scmp.lt.s32.totalorder %s33, 1
        %s660 = scalar_select %p659, %s33, 1
        %s661 = smul.addr %s660, 4
        %s662 = smul.addr %s661, 4
        %s663 = scalar_lea.vmem %s8, %s662
        %p664 = scmp.lt.s32.totalorder %s33, 1
        %s665 = scalar_select %p664, %s33, 1
        %s666 = scalar_lea.vmem %s9, %s665
        %p667 = scmp.lt.s32.totalorder %s33, 1
        %s668 = scalar_select %p667, %s33, 1
        %s669 = smul.addr %s668, 16
        %s670 = smul.addr %s669, 4
        %s671 = scalar_lea.vmem %s10, %s670
        %p672 = scmp.lt.s32.totalorder %s33, 1
        %s673 = scalar_select %p672, %s33, 1
        %s674 = scalar_lea.vmem %s11, %s673
        %p675 = scmp.lt.s32.totalorder %s33, 1
        %s676 = scalar_select %p675, %s33, 1
        %s677 = scalar_lea.vmem %s12, %s676
        %p678 = scmp.lt.s32.totalorder %s33, 1
        %s679 = scalar_select %p678, %s33, 1
        %s680 = scalar_lea.vmem %s13, %s679
        %p682 = scmp.eq.s32.totalorder %s33, 0
        // Predicated region
        $region77: #{tpu_custom_call.1} parent=75 // pred_check
          %p683 = pneg %p682
        $region78: #{tpu_custom_call.1} parent=75 // pred_check_branch
          %685 = sbr.rel (%p683) target = $region80
        $region79: #{tpu_custom_call.1} parent=75 // pred_region
          %v686 = vld [vmem:[%s633] sm:$0xff]
          %vm687 = vcmask 261120
          %688 = vst.msk [vmem:[#allocation2] sm:$0xff] %vm687, %v686
        $region80: #{tpu_custom_call.1} parent=75 // pred_fallthru
          _
        %v689 = vld [vmem:[#allocation2] sm:$0xff]
        %v690 = vpack.c.bf16 %v689, %v689
        %v691 = vld [vmem:[%s641] sm:$0xf]
        %v692 = vld [vmem:[%s641 + $0x4] sm:$0xf]
        %v693 = vld [vmem:[%s641 + $0x8] sm:$0xf]
        %v694 = vld [vmem:[%s641 + $0xc] sm:$0xf]
        %v695 = vld [vmem:[%s644] sm:$0x1]
        %v697 = vlaneseq
        %v698 = vshrl.u32 %v697, 7
        %v699 = vsub.s32 0, %v698
        %v700 = vrot.slane %v695, %v699
        %v706 = vunpack.c.l.b16 %v691
        %v707 = vunpack.c.l.b16 %v692
        %v708 = vunpack.c.l.b16 %v693
        %v709 = vunpack.c.l.b16 %v694
        %v710 = vpack.c.b16 %v707, %v706
        %v711 = vpack.c.b16 %v709, %v708
        %vm714 = vcmask 261120
        %v716 = vsel %vm714, %v690, 0
        %718 = vmatprep.subr.bf16.mxu0 0
        %719 = vmatpush1.bf16.msra.mxu0 0
        %720 = vmatprep.subr.bf16.mxu0 0
        %721 = vmatpush1.bf16.msra.mxu0 0
        %722 = vmatprep.subr.bf16.mxu0 0
        %723 = vmatpush1.bf16.msra.mxu0 0
        %724 = vmatprep.subr.bf16.mxu0 0
        %725 = vmatpush1.bf16.msra.mxu0 0
        %726 = vmatprep.subr.bf16.mxu0 0
        %727 = vmatpush1.bf16.msra.mxu0 0
        %728 = vmatprep.subr.bf16.mxu0 0
        %729 = vmatpush1.bf16.msra.mxu0 0
        %730 = vmatprep.subr.bf16.mxu0 0
        %731 = vmatpush1.bf16.msra.mxu0 %v711
        %732 = vmatprep.subr.bf16.mxu0 0
        %733 = vmatpush1.bf16.msra.mxu0 %v710
        %734 = vmatprep.subr.bf16.mxu0 0
        %735 = vmatpush2.bf16.msra.mxu0 0
        %736 = vmatprep.subr.bf16.mxu0 0
        %737 = vmatpush2.bf16.msra.mxu0 0
        %738 = vmatprep.subr.bf16.mxu0 0
        %739 = vmatpush2.bf16.msra.mxu0 0
        %740 = vmatprep.subr.bf16.mxu0 0
        %741 = vmatpush2.bf16.msra.mxu0 0
        %742 = vmatprep.subr.bf16.mxu0 0
        %743 = vmatpush2.bf16.msra.mxu0 0
        %744 = vmatprep.subr.bf16.mxu0 0
        %745 = vmatpush2.bf16.msra.mxu0 0
        %746 = vmatprep.subr.bf16.mxu0 0
        %747 = vmatpush2.bf16.msra.mxu0 0
        %748 = vmatprep.subr.bf16.mxu0 0
        %749 = vmatpush2.bf16.msra.mxu0 0
        %750 = vmatprep.mubr.bf16.mxu0 0
        %751 = vmatmul.mubr.bf16.gmra.mxu0 %v716
        %v752 = vpop.f32.mrf.mxu0
        %v753 = vadd.f32 %v700, %v752
        %v754 = vpop.f32.mrf.mxu0
        %v755 = vpop.f32.mrf.mxu0
        %v756 = vpop.f32.mrf.mxu0
        %757 = vdwg.mxu0
        %759 = vrot.lane.b32.xlu0 %v753, 120
        %v760 = vpop.permute.xlu0 %759
        %762 = vrot.lane.b32.xlu0 %v753, 112
        %v763 = vpop.permute.xlu0 %762
        %765 = vrot.lane.b32.xlu0 %v753, 104
        %v766 = vpop.permute.xlu0 %765
        %v768 = vpack.c.bf16 %v753, %v753
        %v769 = vpack.c.bf16 %v760, %v760
        %v770 = vpack.c.bf16 %v763, %v763
        %v771 = vpack.c.bf16 %v766, %v766
        %773 = vrot.lane.b32.xlu0 %v768, 96
        %v774 = vpop.permute.xlu0 %773
        %vm775 = vcmask 64512
        %v777 = vsel %vm775, %v768, 0
        %v780 = vsel %vm775, %v774, 0
        %782 = vmatprep.subr.bf16.mxu0 0
        %783 = vmatpush1.bf16.xpose.msra.mxu0 0
        %784 = vmatprep.subr.bf16.mxu0 0
        %785 = vmatpush1.bf16.xpose.msra.mxu0 0
        %786 = vmatprep.subr.bf16.mxu0 0
        %787 = vmatpush1.bf16.xpose.msra.mxu0 0
        %788 = vmatprep.subr.bf16.mxu0 0
        %789 = vmatpush1.bf16.xpose.msra.mxu0 0
        %790 = vmatprep.subr.bf16.mxu0 0
        %791 = vmatpush1.bf16.xpose.msra.mxu0 0
        %792 = vmatprep.subr.bf16.mxu0 0
        %793 = vmatpush1.bf16.xpose.msra.mxu0 0
        %794 = vmatprep.subr.bf16.mxu0 0
        %795 = vmatpush1.bf16.xpose.msra.mxu0 0
        %796 = vmatprep.subr.bf16.mxu0 0
        %797 = vmatpush1.bf16.xpose.msra.mxu0 %v780
        %798 = vmatprep.subr.bf16.mxu0 0
        %799 = vmatpush2.bf16.xpose.msra.mxu0 0
        %800 = vmatprep.subr.bf16.mxu0 0
        %801 = vmatpush2.bf16.xpose.msra.mxu0 0
        %802 = vmatprep.subr.bf16.mxu0 0
        %803 = vmatpush2.bf16.xpose.msra.mxu0 0
        %804 = vmatprep.subr.bf16.mxu0 0
        %805 = vmatpush2.bf16.xpose.msra.mxu0 0
        %806 = vmatprep.subr.bf16.mxu0 0
        %807 = vmatpush2.bf16.xpose.msra.mxu0 0
        %808 = vmatprep.subr.bf16.mxu0 0
        %809 = vmatpush2.bf16.xpose.msra.mxu0 0
        %810 = vmatprep.subr.bf16.mxu0 0
        %811 = vmatpush2.bf16.xpose.msra.mxu0 0
        %812 = vmatprep.subr.bf16.mxu0 0
        %813 = vmatpush2.bf16.xpose.msra.mxu0 0
        %814 = vmatprep.mubr.bf16.mxu0 0
        %815 = vmatmul.mubr.bf16.gmra.mxu0 %v777
        %v816 = vpop.f32.mrf.mxu0
        %v817 = vadd.f32 0.0, %v816
        %v818 = vpop.f32.mrf.mxu0
        %v819 = vpop.f32.mrf.mxu0
        %v820 = vpop.f32.mrf.mxu0
        %821 = vdwg.mxu0
        %823 = vrot.lane.b32.xlu0 %v769, 96
        %v824 = vpop.permute.xlu0 %823
        %v826 = vsel %vm775, %v769, 0
        %v829 = vsel %vm775, %v824, 0
        %831 = vmatprep.subr.bf16.mxu0 0
        %832 = vmatpush1.bf16.xpose.msra.mxu0 0
        %833 = vmatprep.subr.bf16.mxu0 0
        %834 = vmatpush1.bf16.xpose.msra.mxu0 0
        %835 = vmatprep.subr.bf16.mxu0 0
        %836 = vmatpush1.bf16.xpose.msra.mxu0 0
        %837 = vmatprep.subr.bf16.mxu0 0
        %838 = vmatpush1.bf16.xpose.msra.mxu0 0
        %839 = vmatprep.subr.bf16.mxu0 0
        %840 = vmatpush1.bf16.xpose.msra.mxu0 0
        %841 = vmatprep.subr.bf16.mxu0 0
        %842 = vmatpush1.bf16.xpose.msra.mxu0 0
        %843 = vmatprep.subr.bf16.mxu0 0
        %844 = vmatpush1.bf16.xpose.msra.mxu0 0
        %845 = vmatprep.subr.bf16.mxu0 0
        %846 = vmatpush1.bf16.xpose.msra.mxu0 %v829
        %847 = vmatprep.subr.bf16.mxu0 0
        %848 = vmatpush2.bf16.xpose.msra.mxu0 0
        %849 = vmatprep.subr.bf16.mxu0 0
        %850 = vmatpush2.bf16.xpose.msra.mxu0 0
        %851 = vmatprep.subr.bf16.mxu0 0
        %852 = vmatpush2.bf16.xpose.msra.mxu0 0
        %853 = vmatprep.subr.bf16.mxu0 0
        %854 = vmatpush2.bf16.xpose.msra.mxu0 0
        %855 = vmatprep.subr.bf16.mxu0 0
        %856 = vmatpush2.bf16.xpose.msra.mxu0 0
        %857 = vmatprep.subr.bf16.mxu0 0
        %858 = vmatpush2.bf16.xpose.msra.mxu0 0
        %859 = vmatprep.subr.bf16.mxu0 0
        %860 = vmatpush2.bf16.xpose.msra.mxu0 0
        %861 = vmatprep.subr.bf16.mxu0 0
        %862 = vmatpush2.bf16.xpose.msra.mxu0 0
        %863 = vmatprep.mubr.bf16.mxu0 0
        %864 = vmatmul.mubr.bf16.gmra.mxu0 %v826
        %v865 = vpop.f32.mrf.mxu0
        %v866 = vadd.f32 0.0, %v865
        %v867 = vpop.f32.mrf.mxu0
        %v868 = vpop.f32.mrf.mxu0
        %v869 = vpop.f32.mrf.mxu0
        %870 = vdwg.mxu0
        %872 = vrot.lane.b32.xlu0 %v770, 96
        %v873 = vpop.permute.xlu0 %872
        %v875 = vsel %vm775, %v770, 0
        %v878 = vsel %vm775, %v873, 0
        %880 = vmatprep.subr.bf16.mxu0 0
        %881 = vmatpush1.bf16.xpose.msra.mxu0 0
        %882 = vmatprep.subr.bf16.mxu0 0
        %883 = vmatpush1.bf16.xpose.msra.mxu0 0
        %884 = vmatprep.subr.bf16.mxu0 0
        %885 = vmatpush1.bf16.xpose.msra.mxu0 0
        %886 = vmatprep.subr.bf16.mxu0 0
        %887 = vmatpush1.bf16.xpose.msra.mxu0 0
        %888 = vmatprep.subr.bf16.mxu0 0
        %889 = vmatpush1.bf16.xpose.msra.mxu0 0
        %890 = vmatprep.subr.bf16.mxu0 0
        %891 = vmatpush1.bf16.xpose.msra.mxu0 0
        %892 = vmatprep.subr.bf16.mxu0 0
        %893 = vmatpush1.bf16.xpose.msra.mxu0 0
        %894 = vmatprep.subr.bf16.mxu0 0
        %895 = vmatpush1.bf16.xpose.msra.mxu0 %v878
        %896 = vmatprep.subr.bf16.mxu0 0
        %897 = vmatpush2.bf16.xpose.msra.mxu0 0
        %898 = vmatprep.subr.bf16.mxu0 0
        %899 = vmatpush2.bf16.xpose.msra.mxu0 0
        %900 = vmatprep.subr.bf16.mxu0 0
        %901 = vmatpush2.bf16.xpose.msra.mxu0 0
        %902 = vmatprep.subr.bf16.mxu0 0
        %903 = vmatpush2.bf16.xpose.msra.mxu0 0
        %904 = vmatprep.subr.bf16.mxu0 0
        %905 = vmatpush2.bf16.xpose.msra.mxu0 0
        %906 = vmatprep.subr.bf16.mxu0 0
        %907 = vmatpush2.bf16.xpose.msra.mxu0 0
        %908 = vmatprep.subr.bf16.mxu0 0
        %909 = vmatpush2.bf16.xpose.msra.mxu0 0
        %910 = vmatprep.subr.bf16.mxu0 0
        %911 = vmatpush2.bf16.xpose.msra.mxu0 0
        %912 = vmatprep.mubr.bf16.mxu0 0
        %913 = vmatmul.mubr.bf16.gmra.mxu0 %v875
        %v914 = vpop.f32.mrf.mxu0
        %v915 = vadd.f32 0.0, %v914
        %v916 = vpop.f32.mrf.mxu0
        %v917 = vpop.f32.mrf.mxu0
        %v918 = vpop.f32.mrf.mxu0
        %919 = vdwg.mxu0
        %921 = vrot.lane.b32.xlu0 %v771, 96
        %v922 = vpop.permute.xlu0 %921
        %v924 = vsel %vm775, %v771, 0
        %v927 = vsel %vm775, %v922, 0
        %929 = vmatprep.subr.bf16.mxu0 0
        %930 = vmatpush1.bf16.xpose.msra.mxu0 0
        %931 = vmatprep.subr.bf16.mxu0 0
        %932 = vmatpush1.bf16.xpose.msra.mxu0 0
        %933 = vmatprep.subr.bf16.mxu0 0
        %934 = vmatpush1.bf16.xpose.msra.mxu0 0
        %935 = vmatprep.subr.bf16.mxu0 0
        %936 = vmatpush1.bf16.xpose.msra.mxu0 0
        %937 = vmatprep.subr.bf16.mxu0 0
        %938 = vmatpush1.bf16.xpose.msra.mxu0 0
        %939 = vmatprep.subr.bf16.mxu0 0
        %940 = vmatpush1.bf16.xpose.msra.mxu0 0
        %941 = vmatprep.subr.bf16.mxu0 0
        %942 = vmatpush1.bf16.xpose.msra.mxu0 0
        %943 = vmatprep.subr.bf16.mxu0 0
        %944 = vmatpush1.bf16.xpose.msra.mxu0 %v927
        %945 = vmatprep.subr.bf16.mxu0 0
        %946 = vmatpush2.bf16.xpose.msra.mxu0 0
        %947 = vmatprep.subr.bf16.mxu0 0
        %948 = vmatpush2.bf16.xpose.msra.mxu0 0
        %949 = vmatprep.subr.bf16.mxu0 0
        %950 = vmatpush2.bf16.xpose.msra.mxu0 0
        %951 = vmatprep.subr.bf16.mxu0 0
        %952 = vmatpush2.bf16.xpose.msra.mxu0 0
        %953 = vmatprep.subr.bf16.mxu0 0
        %954 = vmatpush2.bf16.xpose.msra.mxu0 0
        %955 = vmatprep.subr.bf16.mxu0 0
        %956 = vmatpush2.bf16.xpose.msra.mxu0 0
        %957 = vmatprep.subr.bf16.mxu0 0
        %958 = vmatpush2.bf16.xpose.msra.mxu0 0
        %959 = vmatprep.subr.bf16.mxu0 0
        %960 = vmatpush2.bf16.xpose.msra.mxu0 0
        %961 = vmatprep.mubr.bf16.mxu0 0
        %962 = vmatmul.mubr.bf16.gmra.mxu0 %v924
        %v963 = vpop.f32.mrf.mxu0
        %v964 = vadd.f32 0.0, %v963
        %v965 = vpop.f32.mrf.mxu0
        %v966 = vpop.f32.mrf.mxu0
        %v967 = vpop.f32.mrf.mxu0
        %968 = vdwg.mxu0
        %v969 = vmul.f32 %v817, 0.35355338
        %v970 = vmul.f32 %v866, 0.35355338
        %v971 = vmul.f32 %v915, 0.35355338
        %v972 = vmul.f32 %v964, 0.35355338
        %v973 = vld [vmem:[%s636] sm:$0x1]
        %v975 = vlaneseq
        %v976 = vshrl.u32 %v975, 7
        %v977 = vsub.s32 0, %v976
        %v978 = vrot.slane %v973, %v977
        %v980 = vadd.f32 %v969, %v978
        %v981 = vadd.f32 %v970, %v978
        %v982 = vadd.f32 %v971, %v978
        %v983 = vadd.f32 %v972, %v978
        %v984 = vsel %vm775, %v980, -inf
        %985 = vmax.xlane.f32.xlu0 %v984
        %v986 = vpop.xlane.xlu0 %985
        %v987 = vsel %vm775, %v981, -inf
        %988 = vmax.xlane.f32.xlu0 %v987
        %v989 = vpop.xlane.xlu0 %988
        %v990 = vsel %vm775, %v982, -inf
        %991 = vmax.xlane.f32.xlu0 %v990
        %v992 = vpop.xlane.xlu0 %991
        %v993 = vsel %vm775, %v983, -inf
        %994 = vmax.xlane.f32.xlu0 %v993
        %v995 = vpop.xlane.xlu0 %994
        %v996 = vsub.f32 %v980, %v986
        %v997 = vsub.f32 %v981, %v989
        %v998 = vsub.f32 %v982, %v992
        %v999 = vsub.f32 %v983, %v995
        %v1000 = vmul.f32 %v996, 1.442695
        %v1001 = vpow.pop %v1000
        %v1002 = vmul.f32 %v997, 1.442695
        %v1003 = vpow.pop %v1002
        %v1004 = vmul.f32 %v998, 1.442695
        %v1005 = vpow.pop %v1004
        %v1006 = vmul.f32 %v999, 1.442695
        %v1007 = vpow.pop %v1006
        %v1008 = vsel %vm775, %v1001, 0.0
        %1009 = vadd.xlane.f32.xlu0 %v1008
        %v1010 = vpop.xlane.xlu0 %1009
        %v1011 = vsel %vm775, %v1003, 0.0
        %1012 = vadd.xlane.f32.xlu0 %v1011
        %v1013 = vpop.xlane.xlu0 %1012
        %v1014 = vsel %vm775, %v1005, 0.0
        %1015 = vadd.xlane.f32.xlu0 %v1014
        %v1016 = vpop.xlane.xlu0 %1015
        %v1017 = vsel %vm775, %v1007, 0.0
        %1018 = vadd.xlane.f32.xlu0 %v1017
        %v1019 = vpop.xlane.xlu0 %1018
        %v1020 = vrcp.pop %v1010
        %v1021 = vrcp.pop %v1013
        %v1022 = vrcp.pop %v1016
        %v1023 = vrcp.pop %v1019
        %v1024 = vmul.f32 %v1001, %v1020
        %v1025 = vmul.f32 %v1003, %v1021
        %v1026 = vmul.f32 %v1005, %v1022
        %v1027 = vmul.f32 %v1007, %v1023
        %v1028 = vpack.c.bf16 %v1024, %v1024
        %v1029 = vpack.c.bf16 %v1025, %v1025
        %v1030 = vpack.c.bf16 %v1026, %v1026
        %v1031 = vpack.c.bf16 %v1027, %v1027
        %1032 = vrot.lane.b32.xlu0 %v768, 64
        %v1033 = vpop.permute.xlu0 %1032
        %v1035 = vsel %vm775, %v1028, 0
        %vm1037 = vcmask 1043456
        %v1039 = vsel %vm1037, %v1033, 0
        %1041 = vmatprep.subr.bf16.mxu0 0
        %1042 = vmatpush1.bf16.msra.mxu0 0
        %1043 = vmatprep.subr.bf16.mxu0 0
        %1044 = vmatpush1.bf16.msra.mxu0 0
        %1045 = vmatprep.subr.bf16.mxu0 0
        %1046 = vmatpush1.bf16.msra.mxu0 0
        %1047 = vmatprep.subr.bf16.mxu0 0
        %1048 = vmatpush1.bf16.msra.mxu0 0
        %1049 = vmatprep.subr.bf16.mxu0 0
        %1050 = vmatpush1.bf16.msra.mxu0 0
        %1051 = vmatprep.subr.bf16.mxu0 0
        %1052 = vmatpush1.bf16.msra.mxu0 0
        %1053 = vmatprep.subr.bf16.mxu0 0
        %1054 = vmatpush1.bf16.msra.mxu0 0
        %1055 = vmatprep.subr.bf16.mxu0 0
        %1056 = vmatpush1.bf16.msra.mxu0 %v1039
        %1057 = vmatprep.subr.bf16.mxu0 0
        %1058 = vmatpush2.bf16.msra.mxu0 0
        %1059 = vmatprep.subr.bf16.mxu0 0
        %1060 = vmatpush2.bf16.msra.mxu0 0
        %1061 = vmatprep.subr.bf16.mxu0 0
        %1062 = vmatpush2.bf16.msra.mxu0 0
        %1063 = vmatprep.subr.bf16.mxu0 0
        %1064 = vmatpush2.bf16.msra.mxu0 0
        %1065 = vmatprep.subr.bf16.mxu0 0
        %1066 = vmatpush2.bf16.msra.mxu0 0
        %1067 = vmatprep.subr.bf16.mxu0 0
        %1068 = vmatpush2.bf16.msra.mxu0 0
        %1069 = vmatprep.subr.bf16.mxu0 0
        %1070 = vmatpush2.bf16.msra.mxu0 0
        %1071 = vmatprep.subr.bf16.mxu0 0
        %1072 = vmatpush2.bf16.msra.mxu0 0
        %1073 = vmatprep.mubr.bf16.mxu0 0
        %1074 = vmatmul.mubr.bf16.gmra.mxu0 %v1035
        %v1075 = vpop.f32.mrf.mxu0
        %v1076 = vadd.f32 0.0, %v1075
        %v1077 = vpop.f32.mrf.mxu0
        %v1078 = vpop.f32.mrf.mxu0
        %v1079 = vpop.f32.mrf.mxu0
        %1080 = vdwg.mxu0
        %1081 = vrot.lane.b32.xlu0 %v769, 64
        %v1082 = vpop.permute.xlu0 %1081
        %v1084 = vsel %vm775, %v1029, 0
        %v1087 = vsel %vm1037, %v1082, 0
        %1089 = vmatprep.subr.bf16.mxu0 0
        %1090 = vmatpush1.bf16.msra.mxu0 0
        %1091 = vmatprep.subr.bf16.mxu0 0
        %1092 = vmatpush1.bf16.msra.mxu0 0
        %1093 = vmatprep.subr.bf16.mxu0 0
        %1094 = vmatpush1.bf16.msra.mxu0 0
        %1095 = vmatprep.subr.bf16.mxu0 0
        %1096 = vmatpush1.bf16.msra.mxu0 0
        %1097 = vmatprep.subr.bf16.mxu0 0
        %1098 = vmatpush1.bf16.msra.mxu0 0
        %1099 = vmatprep.subr.bf16.mxu0 0
        %1100 = vmatpush1.bf16.msra.mxu0 0
        %1101 = vmatprep.subr.bf16.mxu0 0
        %1102 = vmatpush1.bf16.msra.mxu0 0
        %1103 = vmatprep.subr.bf16.mxu0 0
        %1104 = vmatpush1.bf16.msra.mxu0 %v1087
        %1105 = vmatprep.subr.bf16.mxu0 0
        %1106 = vmatpush2.bf16.msra.mxu0 0
        %1107 = vmatprep.subr.bf16.mxu0 0
        %1108 = vmatpush2.bf16.msra.mxu0 0
        %1109 = vmatprep.subr.bf16.mxu0 0
        %1110 = vmatpush2.bf16.msra.mxu0 0
        %1111 = vmatprep.subr.bf16.mxu0 0
        %1112 = vmatpush2.bf16.msra.mxu0 0
        %1113 = vmatprep.subr.bf16.mxu0 0
        %1114 = vmatpush2.bf16.msra.mxu0 0
        %1115 = vmatprep.subr.bf16.mxu0 0
        %1116 = vmatpush2.bf16.msra.mxu0 0
        %1117 = vmatprep.subr.bf16.mxu0 0
        %1118 = vmatpush2.bf16.msra.mxu0 0
        %1119 = vmatprep.subr.bf16.mxu0 0
        %1120 = vmatpush2.bf16.msra.mxu0 0
        %1121 = vmatprep.mubr.bf16.mxu0 0
        %1122 = vmatmul.mubr.bf16.gmra.mxu0 %v1084
        %v1123 = vpop.f32.mrf.mxu0
        %v1124 = vadd.f32 0.0, %v1123
        %v1125 = vpop.f32.mrf.mxu0
        %v1126 = vpop.f32.mrf.mxu0
        %v1127 = vpop.f32.mrf.mxu0
        %1128 = vdwg.mxu0
        %1129 = vrot.lane.b32.xlu0 %v770, 64
        %v1130 = vpop.permute.xlu0 %1129
        %v1132 = vsel %vm775, %v1030, 0
        %v1135 = vsel %vm1037, %v1130, 0
        %1137 = vmatprep.subr.bf16.mxu0 0
        %1138 = vmatpush1.bf16.msra.mxu0 0
        %1139 = vmatprep.subr.bf16.mxu0 0
        %1140 = vmatpush1.bf16.msra.mxu0 0
        %1141 = vmatprep.subr.bf16.mxu0 0
        %1142 = vmatpush1.bf16.msra.mxu0 0
        %1143 = vmatprep.subr.bf16.mxu0 0
        %1144 = vmatpush1.bf16.msra.mxu0 0
        %1145 = vmatprep.subr.bf16.mxu0 0
        %1146 = vmatpush1.bf16.msra.mxu0 0
        %1147 = vmatprep.subr.bf16.mxu0 0
        %1148 = vmatpush1.bf16.msra.mxu0 0
        %1149 = vmatprep.subr.bf16.mxu0 0
        %1150 = vmatpush1.bf16.msra.mxu0 0
        %1151 = vmatprep.subr.bf16.mxu0 0
        %1152 = vmatpush1.bf16.msra.mxu0 %v1135
        %1153 = vmatprep.subr.bf16.mxu0 0
        %1154 = vmatpush2.bf16.msra.mxu0 0
        %1155 = vmatprep.subr.bf16.mxu0 0
        %1156 = vmatpush2.bf16.msra.mxu0 0
        %1157 = vmatprep.subr.bf16.mxu0 0
        %1158 = vmatpush2.bf16.msra.mxu0 0
        %1159 = vmatprep.subr.bf16.mxu0 0
        %1160 = vmatpush2.bf16.msra.mxu0 0
        %1161 = vmatprep.subr.bf16.mxu0 0
        %1162 = vmatpush2.bf16.msra.mxu0 0
        %1163 = vmatprep.subr.bf16.mxu0 0
        %1164 = vmatpush2.bf16.msra.mxu0 0
        %1165 = vmatprep.subr.bf16.mxu0 0
        %1166 = vmatpush2.bf16.msra.mxu0 0
        %1167 = vmatprep.subr.bf16.mxu0 0
        %1168 = vmatpush2.bf16.msra.mxu0 0
        %1169 = vmatprep.mubr.bf16.mxu0 0
        %1170 = vmatmul.mubr.bf16.gmra.mxu0 %v1132
        %v1171 = vpop.f32.mrf.mxu0
        %v1172 = vadd.f32 0.0, %v1171
        %v1173 = vpop.f32.mrf.mxu0
        %v1174 = vpop.f32.mrf.mxu0
        %v1175 = vpop.f32.mrf.mxu0
        %1176 = vdwg.mxu0
        %1177 = vrot.lane.b32.xlu0 %v771, 64
        %v1178 = vpop.permute.xlu0 %1177
        %v1180 = vsel %vm775, %v1031, 0
        %v1183 = vsel %vm1037, %v1178, 0
        %1185 = vmatprep.subr.bf16.mxu0 0
        %1186 = vmatpush1.bf16.msra.mxu0 0
        %1187 = vmatprep.subr.bf16.mxu0 0
        %1188 = vmatpush1.bf16.msra.mxu0 0
        %1189 = vmatprep.subr.bf16.mxu0 0
        %1190 = vmatpush1.bf16.msra.mxu0 0
        %1191 = vmatprep.subr.bf16.mxu0 0
        %1192 = vmatpush1.bf16.msra.mxu0 0
        %1193 = vmatprep.subr.bf16.mxu0 0
        %1194 = vmatpush1.bf16.msra.mxu0 0
        %1195 = vmatprep.subr.bf16.mxu0 0
        %1196 = vmatpush1.bf16.msra.mxu0 0
        %1197 = vmatprep.subr.bf16.mxu0 0
        %1198 = vmatpush1.bf16.msra.mxu0 0
        %1199 = vmatprep.subr.bf16.mxu0 0
        %1200 = vmatpush1.bf16.msra.mxu0 %v1183
        %1201 = vmatprep.subr.bf16.mxu0 0
        %1202 = vmatpush2.bf16.msra.mxu0 0
        %1203 = vmatprep.subr.bf16.mxu0 0
        %1204 = vmatpush2.bf16.msra.mxu0 0
        %1205 = vmatprep.subr.bf16.mxu0 0
        %1206 = vmatpush2.bf16.msra.mxu0 0
        %1207 = vmatprep.subr.bf16.mxu0 0
        %1208 = vmatpush2.bf16.msra.mxu0 0
        %1209 = vmatprep.subr.bf16.mxu0 0
        %1210 = vmatpush2.bf16.msra.mxu0 0
        %1211 = vmatprep.subr.bf16.mxu0 0
        %1212 = vmatpush2.bf16.msra.mxu0 0
        %1213 = vmatprep.subr.bf16.mxu0 0
        %1214 = vmatpush2.bf16.msra.mxu0 0
        %1215 = vmatprep.subr.bf16.mxu0 0
        %1216 = vmatpush2.bf16.msra.mxu0 0
        %1217 = vmatprep.mubr.bf16.mxu0 0
        %1218 = vmatmul.mubr.bf16.gmra.mxu0 %v1180
        %v1219 = vpop.f32.mrf.mxu0
        %v1220 = vadd.f32 0.0, %v1219
        %v1221 = vpop.f32.mrf.mxu0
        %v1222 = vpop.f32.mrf.mxu0
        %v1223 = vpop.f32.mrf.mxu0
        %1224 = vdwg.mxu0
        %v1225 = vpack.c.bf16 %v1076, %v1076
        %v1226 = vpack.c.bf16 %v1124, %v1124
        %v1227 = vpack.c.bf16 %v1172, %v1172
        %v1228 = vpack.c.bf16 %v1220, %v1220
        %v1229 = vld [vmem:[%s649] sm:$0xf]
        %v1230 = vld [vmem:[%s649 + $0x4] sm:$0xf]
        %v1231 = vld [vmem:[%s649 + $0x8] sm:$0xf]
        %v1232 = vld [vmem:[%s649 + $0xc] sm:$0xf]
        %v1234 = vsel %vm775, %v1225, 0
        %v1237 = vsel %vm1037, %v1229, 0
        %1239 = vmatprep.subr.bf16.mxu0 0
        %1240 = vmatpush1.bf16.msra.mxu0 0
        %1241 = vmatprep.subr.bf16.mxu0 0
        %1242 = vmatpush1.bf16.msra.mxu0 0
        %1243 = vmatprep.subr.bf16.mxu0 0
        %1244 = vmatpush1.bf16.msra.mxu0 0
        %1245 = vmatprep.subr.bf16.mxu0 0
        %1246 = vmatpush1.bf16.msra.mxu0 0
        %1247 = vmatprep.subr.bf16.mxu0 0
        %1248 = vmatpush1.bf16.msra.mxu0 0
        %1249 = vmatprep.subr.bf16.mxu0 0
        %1250 = vmatpush1.bf16.msra.mxu0 0
        %1251 = vmatprep.subr.bf16.mxu0 0
        %1252 = vmatpush1.bf16.msra.mxu0 0
        %1253 = vmatprep.subr.bf16.mxu0 0
        %1254 = vmatpush1.bf16.msra.mxu0 %v1237
        %1255 = vmatprep.subr.bf16.mxu0 0
        %1256 = vmatpush2.bf16.msra.mxu0 0
        %1257 = vmatprep.subr.bf16.mxu0 0
        %1258 = vmatpush2.bf16.msra.mxu0 0
        %1259 = vmatprep.subr.bf16.mxu0 0
        %1260 = vmatpush2.bf16.msra.mxu0 0
        %1261 = vmatprep.subr.bf16.mxu0 0
        %1262 = vmatpush2.bf16.msra.mxu0 0
        %1263 = vmatprep.subr.bf16.mxu0 0
        %1264 = vmatpush2.bf16.msra.mxu0 0
        %1265 = vmatprep.subr.bf16.mxu0 0
        %1266 = vmatpush2.bf16.msra.mxu0 0
        %1267 = vmatprep.subr.bf16.mxu0 0
        %1268 = vmatpush2.bf16.msra.mxu0 0
        %1269 = vmatprep.subr.bf16.mxu0 0
        %1270 = vmatpush2.bf16.msra.mxu0 0
        %1271 = vmatprep.mubr.bf16.mxu0 0
        %1272 = vmatmul.mubr.bf16.gmra.mxu0 %v1234
        %v1273 = vpop.f32.mrf.mxu0
        %v1274 = vadd.f32 0.0, %v1273
        %v1275 = vpop.f32.mrf.mxu0
        %v1276 = vpop.f32.mrf.mxu0
        %v1277 = vpop.f32.mrf.mxu0
        %1278 = vdwg.mxu0
        %v1280 = vsel %vm775, %v1226, 0
        %v1283 = vsel %vm1037, %v1230, 0
        %1285 = vmatprep.subr.bf16.mxu0 0
        %1286 = vmatpush1.bf16.msra.mxu0 0
        %1287 = vmatprep.subr.bf16.mxu0 0
        %1288 = vmatpush1.bf16.msra.mxu0 0
        %1289 = vmatprep.subr.bf16.mxu0 0
        %1290 = vmatpush1.bf16.msra.mxu0 0
        %1291 = vmatprep.subr.bf16.mxu0 0
        %1292 = vmatpush1.bf16.msra.mxu0 0
        %1293 = vmatprep.subr.bf16.mxu0 0
        %1294 = vmatpush1.bf16.msra.mxu0 0
        %1295 = vmatprep.subr.bf16.mxu0 0
        %1296 = vmatpush1.bf16.msra.mxu0 0
        %1297 = vmatprep.subr.bf16.mxu0 0
        %1298 = vmatpush1.bf16.msra.mxu0 0
        %1299 = vmatprep.subr.bf16.mxu0 0
        %1300 = vmatpush1.bf16.msra.mxu0 %v1283
        %1301 = vmatprep.subr.bf16.mxu0 0
        %1302 = vmatpush2.bf16.msra.mxu0 0
        %1303 = vmatprep.subr.bf16.mxu0 0
        %1304 = vmatpush2.bf16.msra.mxu0 0
        %1305 = vmatprep.subr.bf16.mxu0 0
        %1306 = vmatpush2.bf16.msra.mxu0 0
        %1307 = vmatprep.subr.bf16.mxu0 0
        %1308 = vmatpush2.bf16.msra.mxu0 0
        %1309 = vmatprep.subr.bf16.mxu0 0
        %1310 = vmatpush2.bf16.msra.mxu0 0
        %1311 = vmatprep.subr.bf16.mxu0 0
        %1312 = vmatpush2.bf16.msra.mxu0 0
        %1313 = vmatprep.subr.bf16.mxu0 0
        %1314 = vmatpush2.bf16.msra.mxu0 0
        %1315 = vmatprep.subr.bf16.mxu0 0
        %1316 = vmatpush2.bf16.msra.mxu0 0
        %1317 = vmatprep.mubr.bf16.mxu0 0
        %1318 = vmatmul.mubr.bf16.gmra.mxu0 %v1280
        %v1319 = vpop.f32.mrf.mxu0
        %v1320 = vadd.f32 0.0, %v1319
        %v1321 = vpop.f32.mrf.mxu0
        %v1322 = vpop.f32.mrf.mxu0
        %v1323 = vpop.f32.mrf.mxu0
        %1324 = vdwg.mxu0
        %v1326 = vsel %vm775, %v1227, 0
        %v1329 = vsel %vm1037, %v1231, 0
        %1331 = vmatprep.subr.bf16.mxu0 0
        %1332 = vmatpush1.bf16.msra.mxu0 0
        %1333 = vmatprep.subr.bf16.mxu0 0
        %1334 = vmatpush1.bf16.msra.mxu0 0
        %1335 = vmatprep.subr.bf16.mxu0 0
        %1336 = vmatpush1.bf16.msra.mxu0 0
        %1337 = vmatprep.subr.bf16.mxu0 0
        %1338 = vmatpush1.bf16.msra.mxu0 0
        %1339 = vmatprep.subr.bf16.mxu0 0
        %1340 = vmatpush1.bf16.msra.mxu0 0
        %1341 = vmatprep.subr.bf16.mxu0 0
        %1342 = vmatpush1.bf16.msra.mxu0 0
        %1343 = vmatprep.subr.bf16.mxu0 0
        %1344 = vmatpush1.bf16.msra.mxu0 0
        %1345 = vmatprep.subr.bf16.mxu0 0
        %1346 = vmatpush1.bf16.msra.mxu0 %v1329
        %1347 = vmatprep.subr.bf16.mxu0 0
        %1348 = vmatpush2.bf16.msra.mxu0 0
        %1349 = vmatprep.subr.bf16.mxu0 0
        %1350 = vmatpush2.bf16.msra.mxu0 0
        %1351 = vmatprep.subr.bf16.mxu0 0
        %1352 = vmatpush2.bf16.msra.mxu0 0
        %1353 = vmatprep.subr.bf16.mxu0 0
        %1354 = vmatpush2.bf16.msra.mxu0 0
        %1355 = vmatprep.subr.bf16.mxu0 0
        %1356 = vmatpush2.bf16.msra.mxu0 0
        %1357 = vmatprep.subr.bf16.mxu0 0
        %1358 = vmatpush2.bf16.msra.mxu0 0
        %1359 = vmatprep.subr.bf16.mxu0 0
        %1360 = vmatpush2.bf16.msra.mxu0 0
        %1361 = vmatprep.subr.bf16.mxu0 0
        %1362 = vmatpush2.bf16.msra.mxu0 0
        %1363 = vmatprep.mubr.bf16.mxu0 0
        %1364 = vmatmul.mubr.bf16.gmra.mxu0 %v1326
        %v1365 = vpop.f32.mrf.mxu0
        %v1366 = vadd.f32 0.0, %v1365
        %v1367 = vpop.f32.mrf.mxu0
        %v1368 = vpop.f32.mrf.mxu0
        %v1369 = vpop.f32.mrf.mxu0
        %1370 = vdwg.mxu0
        %v1372 = vsel %vm775, %v1228, 0
        %v1375 = vsel %vm1037, %v1232, 0
        %1377 = vmatprep.subr.bf16.mxu0 0
        %1378 = vmatpush1.bf16.msra.mxu0 0
        %1379 = vmatprep.subr.bf16.mxu0 0
        %1380 = vmatpush1.bf16.msra.mxu0 0
        %1381 = vmatprep.subr.bf16.mxu0 0
        %1382 = vmatpush1.bf16.msra.mxu0 0
        %1383 = vmatprep.subr.bf16.mxu0 0
        %1384 = vmatpush1.bf16.msra.mxu0 0
        %1385 = vmatprep.subr.bf16.mxu0 0
        %1386 = vmatpush1.bf16.msra.mxu0 0
        %1387 = vmatprep.subr.bf16.mxu0 0
        %1388 = vmatpush1.bf16.msra.mxu0 0
        %1389 = vmatprep.subr.bf16.mxu0 0
        %1390 = vmatpush1.bf16.msra.mxu0 0
        %1391 = vmatprep.subr.bf16.mxu0 0
        %1392 = vmatpush1.bf16.msra.mxu0 %v1375
        %1393 = vmatprep.subr.bf16.mxu0 0
        %1394 = vmatpush2.bf16.msra.mxu0 0
        %1395 = vmatprep.subr.bf16.mxu0 0
        %1396 = vmatpush2.bf16.msra.mxu0 0
        %1397 = vmatprep.subr.bf16.mxu0 0
        %1398 = vmatpush2.bf16.msra.mxu0 0
        %1399 = vmatprep.subr.bf16.mxu0 0
        %1400 = vmatpush2.bf16.msra.mxu0 0
        %1401 = vmatprep.subr.bf16.mxu0 0
        %1402 = vmatpush2.bf16.msra.mxu0 0
        %1403 = vmatprep.subr.bf16.mxu0 0
        %1404 = vmatpush2.bf16.msra.mxu0 0
        %1405 = vmatprep.subr.bf16.mxu0 0
        %1406 = vmatpush2.bf16.msra.mxu0 0
        %1407 = vmatprep.subr.bf16.mxu0 0
        %1408 = vmatpush2.bf16.msra.mxu0 0
        %1409 = vmatprep.mubr.bf16.mxu0 0
        %1410 = vmatmul.mubr.bf16.gmra.mxu0 %v1372
        %v1411 = vpop.f32.mrf.mxu0
        %v1412 = vadd.f32 0.0, %v1411
        %v1413 = vpop.f32.mrf.mxu0
        %v1414 = vpop.f32.mrf.mxu0
        %v1415 = vpop.f32.mrf.mxu0
        %1416 = vdwg.mxu0
        %v1417 = vsel %vm714, %v1274, 0.0
        %v1418 = vsel %vm714, %v1320, 0.0
        %v1419 = vadd.f32 %v1417, %v1418
        %v1420 = vsel %vm714, %v1366, 0.0
        %v1421 = vadd.f32 %v1419, %v1420
        %v1422 = vsel %vm714, %v1412, 0.0
        %v1423 = vadd.f32 %v1421, %v1422
        %v1424 = vld [vmem:[%s652] sm:$0x1]
        %v1426 = vlaneseq
        %v1427 = vshrl.u32 %v1426, 7
        %v1428 = vsub.s32 0, %v1427
        %v1429 = vrot.slane %v1424, %v1428
        %v1431 = vadd.f32 %v1423, %v1429
        %v1432 = vadd.f32 %v1431, %v689
        %v1433 = vld [vmem:[%s655] sm:$0x1]
        %v1434 = vld [vmem:[%s658] sm:$0x1]
        %v1435 = vsel %vm714, %v1432, 0.0
        %1436 = vadd.xlane.f32.xlu0 %v1435
        %v1437 = vpop.xlane.xlu0 %1436
        %v1438 = vrcp.pop 32.0
        %v1439 = vmul.f32 %v1437, %v1438
        %v1440 = vsub.f32 %v1432, %v1439
        %v1441 = vmul.f32 %v1440, %v1440
        %v1442 = vsel %vm714, %v1441, 0.0
        %1443 = vadd.xlane.f32.xlu0 %v1442
        %v1444 = vpop.xlane.xlu0 %1443
        %v1445 = vmul.f32 %v1444, %v1438
        %v1446 = vadd.f32 %v1445, 1e-05
        %v1447 = vrsqrt.pop %v1446
        %v1448 = vmul.f32 %v1440, %v1447
        %v1450 = vlaneseq
        %v1451 = vshrl.u32 %v1450, 7
        %v1452 = vsub.s32 0, %v1451
        %v1453 = vrot.slane %v1433, %v1452
        %v1455 = vmul.f32 %v1448, %v1453
        %v1457 = vlaneseq
        %v1458 = vshrl.u32 %v1457, 7
        %v1459 = vsub.s32 0, %v1458
        %v1460 = vrot.slane %v1434, %v1459
        %v1462 = vadd.f32 %v1455, %v1460
        %v1463 = vpack.c.bf16 %v1462, %v1462
        %v1464 = vld [vmem:[%s663] sm:$0xf]
        %v1465 = vld [vmem:[%s663 + $0x4] sm:$0xf]
        %v1466 = vld [vmem:[%s663 + $0x8] sm:$0xf]
        %v1467 = vld [vmem:[%s663 + $0xc] sm:$0xf]
        %v1468 = vld [vmem:[%s666] sm:$0x1]
        %v1470 = vlaneseq
        %v1471 = vshrl.u32 %v1470, 7
        %v1472 = vsub.s32 0, %v1471
        %v1473 = vrot.slane %v1468, %v1472
        %v1479 = vunpack.c.l.b16 %v1464
        %v1480 = vunpack.c.l.b16 %v1465
        %v1481 = vunpack.c.l.b16 %v1466
        %v1482 = vunpack.c.l.b16 %v1467
        %v1483 = vpack.c.b16 %v1480, %v1479
        %v1484 = vpack.c.b16 %v1482, %v1481
        %v1488 = vsel %vm714, %v1463, 0
        %1490 = vmatprep.subr.bf16.mxu0 0
        %1491 = vmatpush1.bf16.msra.mxu0 0
        %1492 = vmatprep.subr.bf16.mxu0 0
        %1493 = vmatpush1.bf16.msra.mxu0 0
        %1494 = vmatprep.subr.bf16.mxu0 0
        %1495 = vmatpush1.bf16.msra.mxu0 0
        %1496 = vmatprep.subr.bf16.mxu0 0
        %1497 = vmatpush1.bf16.msra.mxu0 0
        %1498 = vmatprep.subr.bf16.mxu0 0
        %1499 = vmatpush1.bf16.msra.mxu0 0
        %1500 = vmatprep.subr.bf16.mxu0 0
        %1501 = vmatpush1.bf16.msra.mxu0 0
        %1502 = vmatprep.subr.bf16.mxu0 0
        %1503 = vmatpush1.bf16.msra.mxu0 %v1484
        %1504 = vmatprep.subr.bf16.mxu0 0
        %1505 = vmatpush1.bf16.msra.mxu0 %v1483
        %1506 = vmatprep.subr.bf16.mxu0 0
        %1507 = vmatpush2.bf16.msra.mxu0 0
        %1508 = vmatprep.subr.bf16.mxu0 0
        %1509 = vmatpush2.bf16.msra.mxu0 0
        %1510 = vmatprep.subr.bf16.mxu0 0
        %1511 = vmatpush2.bf16.msra.mxu0 0
        %1512 = vmatprep.subr.bf16.mxu0 0
        %1513 = vmatpush2.bf16.msra.mxu0 0
        %1514 = vmatprep.subr.bf16.mxu0 0
        %1515 = vmatpush2.bf16.msra.mxu0 0
        %1516 = vmatprep.subr.bf16.mxu0 0
        %1517 = vmatpush2.bf16.msra.mxu0 0
        %1518 = vmatprep.subr.bf16.mxu0 0
        %1519 = vmatpush2.bf16.msra.mxu0 0
        %1520 = vmatprep.subr.bf16.mxu0 0
        %1521 = vmatpush2.bf16.msra.mxu0 0
        %1522 = vmatprep.mubr.bf16.mxu0 0
        %1523 = vmatmul.mubr.bf16.gmra.mxu0 %v1488
        %v1524 = vpop.f32.mrf.mxu0
        %v1525 = vadd.f32 %v1473, %v1524
        %v1526 = vpop.f32.mrf.mxu0
        %v1527 = vpop.f32.mrf.mxu0
        %v1528 = vpop.f32.mrf.mxu0
        %1529 = vdwg.mxu0
        %v1530 = vmul.f32 %v1525, 0.5
        %v1531 = vmul.f32 %v1525, 0.70710677
        %v1532 = verf.f32.pop %v1531
        %v1533 = vadd.f32 %v1532, 1.0
        %v1534 = vmul.f32 %v1530, %v1533
        %v1535 = vpack.c.bf16 %v1534, %v1534
        %v1536 = vld [vmem:[%s671] sm:$0xf]
        %v1537 = vld [vmem:[%s671 + $0x4] sm:$0xf]
        %v1538 = vld [vmem:[%s671 + $0x8] sm:$0xf]
        %v1539 = vld [vmem:[%s671 + $0xc] sm:$0xf]
        %v1540 = vld [vmem:[%s671 + $0x10] sm:$0xf]
        %v1541 = vld [vmem:[%s671 + $0x14] sm:$0xf]
        %v1542 = vld [vmem:[%s671 + $0x18] sm:$0xf]
        %v1543 = vld [vmem:[%s671 + $0x1c] sm:$0xf]
        %v1544 = vld [vmem:[%s671 + $0x20] sm:$0xf]
        %v1545 = vld [vmem:[%s671 + $0x24] sm:$0xf]
        %v1546 = vld [vmem:[%s671 + $0x28] sm:$0xf]
        %v1547 = vld [vmem:[%s671 + $0x2c] sm:$0xf]
        %v1548 = vld [vmem:[%s671 + $0x30] sm:$0xf]
        %v1549 = vld [vmem:[%s671 + $0x34] sm:$0xf]
        %v1550 = vld [vmem:[%s671 + $0x38] sm:$0xf]
        %v1551 = vld [vmem:[%s671 + $0x3c] sm:$0xf]
        %v1552 = vld [vmem:[%s674] sm:$0x1]
        %v1554 = vlaneseq
        %v1555 = vshrl.u32 %v1554, 7
        %v1556 = vsub.s32 0, %v1555
        %v1557 = vrot.slane %v1552, %v1556
        %v1575 = vunpack.c.l.b16 %v1536
        %v1576 = vunpack.c.l.b16 %v1537
        %v1577 = vunpack.c.l.b16 %v1538
        %v1578 = vunpack.c.l.b16 %v1539
        %v1579 = vunpack.c.l.b16 %v1540
        %v1580 = vunpack.c.l.b16 %v1541
        %v1581 = vunpack.c.l.b16 %v1542
        %v1582 = vunpack.c.l.b16 %v1543
        %v1583 = vunpack.c.l.b16 %v1544
        %v1584 = vunpack.c.l.b16 %v1545
        %v1585 = vunpack.c.l.b16 %v1546
        %v1586 = vunpack.c.l.b16 %v1547
        %v1587 = vunpack.c.l.b16 %v1548
        %v1588 = vunpack.c.l.b16 %v1549
        %v1589 = vunpack.c.l.b16 %v1550
        %v1590 = vunpack.c.l.b16 %v1551
        %v1591 = vpack.c.b16 %v1576, %v1575
        %v1592 = vpack.c.b16 %v1578, %v1577
        %v1593 = vpack.c.b16 %v1580, %v1579
        %v1594 = vpack.c.b16 %v1582, %v1581
        %v1595 = vpack.c.b16 %v1584, %v1583
        %v1596 = vpack.c.b16 %v1586, %v1585
        %v1597 = vpack.c.b16 %v1588, %v1587
        %v1598 = vpack.c.b16 %v1590, %v1589
        %1607 = vmatprep.subr.bf16.mxu0 0
        %1608 = vmatpush1.bf16.msra.mxu0 %v1598
        %1609 = vmatprep.subr.bf16.mxu0 0
        %1610 = vmatpush1.bf16.msra.mxu0 %v1597
        %1611 = vmatprep.subr.bf16.mxu0 0
        %1612 = vmatpush1.bf16.msra.mxu0 %v1596
        %1613 = vmatprep.subr.bf16.mxu0 0
        %1614 = vmatpush1.bf16.msra.mxu0 %v1595
        %1615 = vmatprep.subr.bf16.mxu0 0
        %1616 = vmatpush1.bf16.msra.mxu0 %v1594
        %1617 = vmatprep.subr.bf16.mxu0 0
        %1618 = vmatpush1.bf16.msra.mxu0 %v1593
        %1619 = vmatprep.subr.bf16.mxu0 0
        %1620 = vmatpush1.bf16.msra.mxu0 %v1592
        %1621 = vmatprep.subr.bf16.mxu0 0
        %1622 = vmatpush1.bf16.msra.mxu0 %v1591
        %1623 = vmatprep.subr.bf16.mxu0 0
        %1624 = vmatpush2.bf16.msra.mxu0 0
        %1625 = vmatprep.subr.bf16.mxu0 0
        %1626 = vmatpush2.bf16.msra.mxu0 0
        %1627 = vmatprep.subr.bf16.mxu0 0
        %1628 = vmatpush2.bf16.msra.mxu0 0
        %1629 = vmatprep.subr.bf16.mxu0 0
        %1630 = vmatpush2.bf16.msra.mxu0 0
        %1631 = vmatprep.subr.bf16.mxu0 0
        %1632 = vmatpush2.bf16.msra.mxu0 0
        %1633 = vmatprep.subr.bf16.mxu0 0
        %1634 = vmatpush2.bf16.msra.mxu0 0
        %1635 = vmatprep.subr.bf16.mxu0 0
        %1636 = vmatpush2.bf16.msra.mxu0 0
        %1637 = vmatprep.subr.bf16.mxu0 0
        %1638 = vmatpush2.bf16.msra.mxu0 0
        %1639 = vmatprep.mubr.bf16.mxu0 0
        %1640 = vmatmul.mubr.bf16.gmra.mxu0 %v1535
        %v1641 = vpop.f32.mrf.mxu0
        %v1642 = vadd.f32 %v1557, %v1641
        %v1643 = vpop.f32.mrf.mxu0
        %v1644 = vpop.f32.mrf.mxu0
        %v1645 = vpop.f32.mrf.mxu0
        %1646 = vdwg.mxu0
        %v1647 = vadd.f32 %v1642, %v1462
        %v1648 = vld [vmem:[%s677] sm:$0x1]
        %v1649 = vld [vmem:[%s680] sm:$0x1]
        %v1650 = vsel %vm714, %v1647, 0.0
        %1651 = vadd.xlane.f32.xlu0 %v1650
        %v1652 = vpop.xlane.xlu0 %1651
        %v1653 = vmul.f32 %v1652, %v1438
        %v1654 = vsub.f32 %v1647, %v1653
        %v1655 = vmul.f32 %v1654, %v1654
        %v1656 = vsel %vm714, %v1655, 0.0
        %1657 = vadd.xlane.f32.xlu0 %v1656
        %v1658 = vpop.xlane.xlu0 %1657
        %v1659 = vmul.f32 %v1658, %v1438
        %v1660 = vadd.f32 %v1659, 1e-05
        %v1661 = vrsqrt.pop %v1660
        %v1662 = vmul.f32 %v1654, %v1661
        %v1664 = vlaneseq
        %v1665 = vshrl.u32 %v1664, 7
        %v1666 = vsub.s32 0, %v1665
        %v1667 = vrot.slane %v1648, %v1666
        %v1669 = vmul.f32 %v1662, %v1667
        %v1671 = vlaneseq
        %v1672 = vshrl.u32 %v1671, 7
        %v1673 = vsub.s32 0, %v1672
        %v1674 = vrot.slane %v1649, %v1673
        %v1676 = vadd.f32 %v1669, %v1674
        %1677 = vst.msk [vmem:[#allocation2] sm:$0xff] %vm714, %v1676
        %p1678 = scmp.eq.s32.totalorder %s33, 1
        // Predicated region
        $region81: #{tpu_custom_call.1} parent=75 // pred_check
          %p1679 = pneg %p1678
        $region82: #{tpu_custom_call.1} parent=75 // pred_check_branch
          %1681 = sbr.rel (%p1679) target = $region84
        $region83: #{tpu_custom_call.1} parent=75 // pred_region
          %1682 = vst.msk [vmem:[%s629] sm:$0xff] %vm714, %v1676
        $region84: #{tpu_custom_call.1} parent=75 // pred_fallthru
          _
        %s1683 = sand.u32 %s412, 1
        %s1684 = scalar_lea.sflag [#allocation4], %s1683
        %s1685 = sand.u32 %s412, 1
        %s1686 = smul.addr %s1685, 8
        %s1687 = scalar_lea.vmem [#allocation3], %s1686
        // Predicated region
        $region85: #{tpu_custom_call.1} parent=75 // pred_check
          %p1688 = pneg %p422
        $region86: #{tpu_custom_call.1} parent=75 // pred_check_branch
          %1690 = sbr.rel (%p1688) target = $region88
        $region87: #{tpu_custom_call.1} parent=75 // pred_region
          %s1692 = ssub.s32 128, 128
          %1693 = vsyncadd %s1684, %s1692
          %s1694 = smul.addr %s32, 128
          %s1695 = scalar_lea.hbm %s14, %s1694
          %s1697 = sshll.u32 %s1687, 4
          %s1698 = int_to_ptr.vmem [resolvable:$true] %s1697
          %1700 = dma.vmem_to_hbm [thread:$0]  %s1698, 128, %s1695, %s1684
        $region88: #{tpu_custom_call.1} parent=75 // pred_fallthru
          _
      $region76: #{tpu_custom_call.1} parent=5 // pred_fallthru
        _
      %p1701 = scmp.le.s32.totalorder 2, %s23
      // Predicated region
      $region89: #{tpu_custom_call.1} parent=5 // pred_check
        %p1702 = pneg %p1701
      $region90: #{tpu_custom_call.1} parent=5 // pred_check_branch
        %1704 = sbr.rel (%p1702) target = $region92
      $region91: #{tpu_custom_call.1} parent=5 // pred_region
        %s1705 = ssub.s32 %s23, 2
        // Predicated region
        $region93: #{tpu_custom_call.1} parent=91 // pred_check
          %p1706 = pneg %p428
        $region94: #{tpu_custom_call.1} parent=91 // pred_check_branch
          %1708 = sbr.rel (%p1706) target = $region96
        $region95: #{tpu_custom_call.1} parent=91 // pred_region
          %s1709 = sand.u32 %s413, 1
          %s1710 = scalar_lea.sflag [#allocation4], %s1709
          %s1711 = sand.u32 %s413, 1
          %s1712 = smul.addr %s1711, 8
          %s1713 = scalar_lea.vmem [#allocation3], %s1712
          %1714 = dma.done %s1710, 128
        $region96: #{tpu_custom_call.1} parent=91 // pred_fallthru
          _
      $region92: #{tpu_custom_call.1} parent=5 // pred_fallthru
        _
    $region6: #{tpu_custom_call.1} parent=1 // loop_footer
      %s27 = sadd.s32 1, %s23
    $region7: #{tpu_custom_call.1} parent=1 // loop_footer_branch
      %22 = sbr.rel target = $region3
    $region8: #{tpu_custom_call.1} parent=1 // loop_exit
      _
    %1715 = vsyncpa [#allocation4], 1
    %s1716 = scalar_lea.sflag [#allocation4], 1
    %1717 = vsyncpa %s1716, 1

</llo_original>
